<compile_context>
chip_gen: v5e
topology: v5e:2x2
jax: 0.10.0
libtpu: 0.0.40
codegen_flags: <defaults>
</compile_context>

<pallas_src>
import functools

import jax
import jax.numpy as jnp
from jax.experimental import pallas as pl
from jax.experimental.pallas import tpu as pltpu


_LANES = 128   # vreg lane width
_SUB_M = 128   # points1 rows per inner slab
_SUB_K = 256   # points2 cols per inner sub-tile (matches v6e/v7x MXU width)
_NMI = 2       # parallel macro-slabs over M (second "parallel" grid axis)
_C = 8         # augmented contraction width (5 real + 3 zero pad)


def _chamfer_kernel(a_ref, b_ref, o1_ref, o2_ref, colmin_ref, *,
                    m_actual, m_pad, m_slab, k_total):
    """One grid step = one batch element x one macro-slab of points1 rows.

    a_ref      : (1, m_slab, 8)  augmented points1 rows for this slab
    b_ref      : (1, 8, K)       augmented points2 (all K columns)
    o1_ref     : (1, 1, 8, 128)  broadcast scalar: sum over slab rows of sqrt(row min)
    o2_ref     : (1, 1, 8, K)    per-column min over THIS slab's rows (squared)
    colmin_ref : (1, K) VMEM scratch (running column minima for this step)
    """
    mi = pl.program_id(1)
    n_i = m_slab // _SUB_M
    n_j = k_total // _SUB_K

    # Re-initialised every step -> no cross-step state, safe under any
    # megacore split of the two parallel grid axes.
    colmin_ref[...] = jnp.full(colmin_ref.shape, jnp.inf, colmin_ref.dtype)

    # Hoist the tiny augmented points2 sub-tiles once per step (8 x 256 each).
    b_subs = [b_ref[0, :, j * _SUB_K:(j + 1) * _SUB_K] for j in range(n_j)]

    loss1_part = jnp.zeros((1, 1), jnp.float32)

    for i in range(n_i):
        a_slab = a_ref[0, i * _SUB_M:(i + 1) * _SUB_M, :]            # (SUB_M, 8)
        # Lane-dense running row-min (squared); cross-lane reduce deferred.
        row_acc = jnp.full((_SUB_M, _LANES), jnp.inf, jnp.float32)

        for j in range(n_j):
            # Squared pairwise distances for this sub-tile, straight off the
            # MXU and consumed immediately (never materialised at (M, K)).
            d2 = jnp.dot(a_slab, b_subs[j],
                         preferred_element_type=jnp.float32)         # (SUB_M, SUB_K)
            for g in range(_SUB_K // _LANES):
                row_acc = jnp.minimum(
                    row_acc, d2[:, g * _LANES:(g + 1) * _LANES])
            cm = jnp.min(d2, axis=0, keepdims=True)                  # (1, SUB_K)
            sl = slice(j * _SUB_K, (j + 1) * _SUB_K)
            colmin_ref[:, sl] = jnp.minimum(colmin_ref[:, sl], cm)

        # Rows of this slab have now seen every points2 column -> final.
        rmin = jnp.min(row_acc, axis=1, keepdims=True)               # (SUB_M, 1)
        rsqrt = jnp.sqrt(jnp.maximum(rmin, 0.0))
        if m_pad > m_actual:  # static: mask padded duplicate rows out of loss1
            rows = (mi * m_slab + i * _SUB_M
                    + jax.lax.broadcasted_iota(jnp.int32, (_SUB_M, 1), 0))
            rsqrt = jnp.where(rows < m_actual, rsqrt, 0.0)
        loss1_part = loss1_part + jnp.sum(rsqrt, axis=0, keepdims=True)

    o1_ref[...] = jnp.broadcast_to(loss1_part, o1_ref.shape)
    o2_ref[...] = jnp.broadcast_to(colmin_ref[...], o2_ref.shape)


def chamfer_distance_loss(points1, points2, w1=1.0, w2=1.0, each_batch=False,
                          key=None):
    # check_parameters
    assert points1.ndim == 3 and points1.shape[-1] == 3
    assert points2.ndim == 3 and points2.shape[-1] == 3

    if key is None:
        key = jax.random.PRNGKey(0)
    k1, k2 = jax.random.split(key)

    B, N1, _ = points1.shape
    N2 = points2.shape[1]

    # Random sampling with replacement (one index set per call, shared across
    # the batch -- matches the torch.randint semantics of the reference).
    M = min(N1, 2048)
    K = 2048
    idx1 = jax.random.randint(k1, (M,), 0, N1)
    idx2 = jax.random.randint(k2, (K,), 0, N2)

    # Pad M up so every grid step works on full SUB_M slabs.  Padding
    # duplicates an already-sampled point, so column minima (loss2) are
    # unaffected; padded rows are masked out of the row mean (loss1) in-kernel.
    quantum = _NMI * _SUB_M
    M_pad = max(quantum, ((M + quantum - 1) // quantum) * quantum)
    if M_pad > M:
        idx1 = jnp.concatenate(
            [idx1, jnp.broadcast_to(idx1[:1], (M_pad - M,))], axis=0)

    s1 = jnp.take(points1, idx1, axis=1).astype(jnp.float32)    # (B, M_pad, 3)
    s2 = jnp.take(points2, idx2, axis=1).astype(jnp.float32)    # (B, K, 3)

    # Augmented operands: d2 = |p1|^2 + |p2|^2 - 2 p1.p2 as one matmul, with
    # the contraction zero-padded only to 8 lanes (16x less operand DMA than
    # padding to 128), and the points2 operand built directly in (B, 8, K).
    n1 = jnp.sum(s1 * s1, axis=2, keepdims=True)                 # (B, M_pad, 1)
    n2 = jnp.sum(s2 * s2, axis=2, keepdims=True)                 # (B, K, 1)
    a_aug = jnp.concatenate(
        [-2.0 * s1, jnp.ones((B, M_pad, 1), jnp.float32), n1,
         jnp.zeros((B, M_pad, _C - 5), jnp.float32)], axis=2)    # (B, M_pad, 8)
    b_aug = jnp.concatenate(
        [jnp.transpose(s2, (0, 2, 1)), jnp.transpose(n2, (0, 2, 1)),
         jnp.ones((B, 1, K), jnp.float32),
         jnp.zeros((B, _C - 5, K), jnp.float32)], axis=1)        # (B, 8, K)

    m_slab = M_pad // _NMI

    kernel = functools.partial(_chamfer_kernel, m_actual=M, m_pad=M_pad,
                               m_slab=m_slab, k_total=K)

    out1, out2 = pl.pallas_call(
        kernel,
        out_shape=(jax.ShapeDtypeStruct((B, _NMI, 8, _LANES), jnp.float32),
                   jax.ShapeDtypeStruct((B, _NMI, 8, K), jnp.float32)),
        grid_spec=pltpu.PrefetchScalarGridSpec(
            num_scalar_prefetch=0,
            grid=(B, _NMI),          # both axes truly parallel (megacore-friendly)
            in_specs=[
                pl.BlockSpec((1, m_slab, _C), lambda b, mi: (b, mi, 0)),
                pl.BlockSpec((1, _C, K), lambda b, mi: (b, 0, 0)),
            ],
            out_specs=[
                pl.BlockSpec((1, 1, 8, _LANES), lambda b, mi: (b, mi, 0, 0)),
                pl.BlockSpec((1, 1, 8, K), lambda b, mi: (b, mi, 0, 0)),
            ],
            scratch_shapes=[pltpu.VMEM((1, K), jnp.float32)],
        ),
        compiler_params=pltpu.CompilerParams(
            dimension_semantics=("parallel", "parallel")),
        # Per-step VMEM need is well under the default scoped limit now that
        # the (M, tile_k) distance matrix is no longer materialised.
    )(a_aug, b_aug)

    # Combine per-slab partials (cheap K- and NMI-sized work) in XLA.
    loss1 = jnp.sum(out1[:, :, 0, 0], axis=1) / float(M)               # (B,)
    colmin = jnp.min(out2[:, :, 0, :], axis=1)                         # (B, K)
    loss2 = jnp.mean(jnp.sqrt(jnp.maximum(colmin, 0.0)), axis=1)       # (B,)
    per_batch = w1 * loss1 + w2 * loss2
    if each_batch:
        return per_batch
    return jnp.mean(per_batch)


def _reference(points1, points2, idx1, idx2, w1=1.0, w2=1.0):
    # Pure-JAX reference with identical sampled indices.
    s1 = jnp.take(points1, idx1, axis=1)
    s2 = jnp.take(points2, idx2, axis=1)
    diff = s1[:, :, None, :] - s2[:, None, :, :]
    dist = jnp.sqrt(jnp.sum(diff * diff, axis=3))
    loss1 = jnp.min(dist, axis=2).mean(axis=1)
    loss2 = jnp.min(dist, axis=1).mean(axis=1)
    return jnp.mean(w1 * loss1 + w2 * loss2)


if __name__ == "__main__":
    key = jax.random.PRNGKey(0)
    kp1, kp2, ksample = jax.random.split(key, 3)

    B, N1, N2 = 2, 64, 100
    points1 = jax.random.normal(kp1, (B, N1, 3), dtype=jnp.float32)
    points2 = jax.random.normal(kp2, (B, N2, 3), dtype=jnp.float32)

    loss = chamfer_distance_loss(points1, points2, w1=1.0, w2=1.0,
                                 each_batch=False, key=ksample)
    loss = jax.block_until_ready(loss)

    # Sanity check against pure-JAX reference using the same sampled indices.
    k1, k2 = jax.random.split(ksample)
    idx1 = jax.random.randint(k1, (min(N1, 2048),), 0, N1)
    idx2 = jax.random.randint(k2, (2048,), 0, N2)
    ref = _reference(points1, points2, idx1, idx2)
    assert jnp.allclose(loss, ref, rtol=1e-4, atol=1e-4), (loss, ref)

    print("KERNEL_OK")
</pallas_src>

<mosaic_0001>
module attributes {stable_mosaic.version = 11 : i64} {
  func.func @_chamfer_kernel(%arg0: i32, %arg1: i32, %arg2: memref<1x128x8xf32, #tpu.memory_space<vmem>>, %arg3: memref<1x8x2048xf32, #tpu.memory_space<vmem>>, %arg4: memref<1x1x8x128xf32, #tpu.memory_space<vmem>>, %arg5: memref<1x1x8x2048xf32, #tpu.memory_space<vmem>>, %arg6: memref<1x2048xf32, #tpu.memory_space<vmem>>) attributes {dimension_semantics = [#tpu.dimension_semantics<parallel>, #tpu.dimension_semantics<parallel>], iteration_bounds = array<i64: 2, 2>, scalar_prefetch = 0 : i64, scratch_operands = 1 : i64, tpu.core_type = #tpu.core_type<tc>, window_params = [{transform_indices = @transform_0, window_bounds = array<i64: 1, 128, 8>}, {transform_indices = @transform_1, window_bounds = array<i64: 1, 8, 2048>}, {transform_indices = @transform_2, window_bounds = array<i64: 1, 1, 8, 128>}, {transform_indices = @transform_3, window_bounds = array<i64: 1, 1, 8, 2048>}]} {
    %cst = arith.constant 0x7F800000 : f32
    %0 = vector.broadcast %cst : f32 to vector<1x2048xf32>
    %c0 = arith.constant 0 : index
    %c0_0 = arith.constant 0 : index
    %1 = vector.load %arg6[%c0, %c0_0] : memref<1x2048xf32, #tpu.memory_space<vmem>>, vector<1x2048xf32>
    tpu.vector_store %arg6[%c0, %c0_0], %0 {strides = array<i32>} : memref<1x2048xf32, #tpu.memory_space<vmem>>, vector<1x2048xf32>,
    %c0_1 = arith.constant 0 : index
    %c0_2 = arith.constant 0 : index
    %c0_3 = arith.constant 0 : index
    %2 = vector.load %arg3[%c0_1, %c0_2, %c0_3] : memref<1x8x2048xf32, #tpu.memory_space<vmem>>, vector<1x8x256xf32>
    %3 = vector.shape_cast %2 : vector<1x8x256xf32> to vector<8x256xf32>
    %c0_4 = arith.constant 0 : index
    %c0_5 = arith.constant 0 : index
    %c256 = arith.constant 256 : index
    %4 = vector.load %arg3[%c0_4, %c0_5, %c256] : memref<1x8x2048xf32, #tpu.memory_space<vmem>>, vector<1x8x256xf32>
    %5 = vector.shape_cast %4 : vector<1x8x256xf32> to vector<8x256xf32>
    %c0_6 = arith.constant 0 : index
    %c0_7 = arith.constant 0 : index
    %c512 = arith.constant 512 : index
    %6 = vector.load %arg3[%c0_6, %c0_7, %c512] : memref<1x8x2048xf32, #tpu.memory_space<vmem>>, vector<1x8x256xf32>
    %7 = vector.shape_cast %6 : vector<1x8x256xf32> to vector<8x256xf32>
    %c0_8 = arith.constant 0 : index
    %c0_9 = arith.constant 0 : index
    %c768 = arith.constant 768 : index
    %8 = vector.load %arg3[%c0_8, %c0_9, %c768] : memref<1x8x2048xf32, #tpu.memory_space<vmem>>, vector<1x8x256xf32>
    %9 = vector.shape_cast %8 : vector<1x8x256xf32> to vector<8x256xf32>
    %c0_10 = arith.constant 0 : index
    %c0_11 = arith.constant 0 : index
    %c1024 = arith.constant 1024 : index
    %10 = vector.load %arg3[%c0_10, %c0_11, %c1024] : memref<1x8x2048xf32, #tpu.memory_space<vmem>>, vector<1x8x256xf32>
    %11 = vector.shape_cast %10 : vector<1x8x256xf32> to vector<8x256xf32>
    %c0_12 = arith.constant 0 : index
    %c0_13 = arith.constant 0 : index
    %c1280 = arith.constant 1280 : index
    %12 = vector.load %arg3[%c0_12, %c0_13, %c1280] : memref<1x8x2048xf32, #tpu.memory_space<vmem>>, vector<1x8x256xf32>
    %13 = vector.shape_cast %12 : vector<1x8x256xf32> to vector<8x256xf32>
    %c0_14 = arith.constant 0 : index
    %c0_15 = arith.constant 0 : index
    %c1536 = arith.constant 1536 : index
    %14 = vector.load %arg3[%c0_14, %c0_15, %c1536] : memref<1x8x2048xf32, #tpu.memory_space<vmem>>, vector<1x8x256xf32>
    %15 = vector.shape_cast %14 : vector<1x8x256xf32> to vector<8x256xf32>
    %c0_16 = arith.constant 0 : index
    %c0_17 = arith.constant 0 : index
    %c1792 = arith.constant 1792 : index
    %16 = vector.load %arg3[%c0_16, %c0_17, %c1792] : memref<1x8x2048xf32, #tpu.memory_space<vmem>>, vector<1x8x256xf32>
    %17 = vector.shape_cast %16 : vector<1x8x256xf32> to vector<8x256xf32>
    %cst_18 = arith.constant 0.000000e+00 : f32
    %18 = vector.broadcast %cst_18 : f32 to vector<1x1xf32>
    %c0_19 = arith.constant 0 : index
    %c0_20 = arith.constant 0 : index
    %c0_21 = arith.constant 0 : index
    %19 = vector.load %arg2[%c0_19, %c0_20, %c0_21] : memref<1x128x8xf32, #tpu.memory_space<vmem>>, vector<1x128x8xf32>
    %20 = vector.shape_cast %19 : vector<1x128x8xf32> to vector<128x8xf32>
    %cst_22 = arith.constant 0x7F800000 : f32
    %21 = vector.broadcast %cst_22 : f32 to vector<128x128xf32>
    %cst_23 = arith.constant dense<0.000000e+00> : vector<128x256xf32>
    %22 = tpu.matmul %20, %3, %cst_23 {dimension_numbers = #tpu.dot_dimension_numbers<[1], [0], [0], [1], [0, 0, 1, 1], [], []>} : vector<128x8xf32>, vector<8x256xf32>, vector<128x256xf32> -> vector<128x256xf32>
    %23 = vector.extract_strided_slice %22 {offsets = [0, 0], sizes = [128, 128], strides = [1, 1]} : vector<128x256xf32> to vector<128x128xf32>
    %24 = arith.minimumf %21, %23 : vector<128x128xf32>
    %25 = vector.extract_strided_slice %22 {offsets = [0, 128], sizes = [128, 128], strides = [1, 1]} : vector<128x256xf32> to vector<128x128xf32>
    %26 = arith.minimumf %24, %25 : vector<128x128xf32>
    %cst_24 = arith.constant dense<0x7F800000> : vector<256xf32>
    %27 = vector.multi_reduction <minimumf>, %22, %cst_24 [0] : vector<128x256xf32> to vector<256xf32>
    %28 = vector.shape_cast %27 : vector<256xf32> to vector<1x256xf32>
    %c0_25 = arith.constant 0 : index
    %c0_26 = arith.constant 0 : index
    %29 = vector.load %arg6[%c0_25, %c0_26] : memref<1x2048xf32, #tpu.memory_space<vmem>>, vector<1x256xf32>
    %30 = arith.minimumf %29, %28 : vector<1x256xf32>
    %c0_27 = arith.constant 0 : index
    %c0_28 = arith.constant 0 : index
    %31 = vector.load %arg6[%c0_27, %c0_28] : memref<1x2048xf32, #tpu.memory_space<vmem>>, vector<1x256xf32>
    tpu.vector_store %arg6[%c0_27, %c0_28], %30 {strides = array<i32>} : memref<1x2048xf32, #tpu.memory_space<vmem>>, vector<1x256xf32>,
    %cst_29 = arith.constant dense<0.000000e+00> : vector<128x256xf32>
    %32 = tpu.matmul %20, %5, %cst_29 {dimension_numbers = #tpu.dot_dimension_numbers<[1], [0], [0], [1], [0, 0, 1, 1], [], []>} : vector<128x8xf32>, vector<8x256xf32>, vector<128x256xf32> -> vector<128x256xf32>
    %33 = vector.extract_strided_slice %32 {offsets = [0, 0], sizes = [128, 128], strides = [1, 1]} : vector<128x256xf32> to vector<128x128xf32>
    %34 = arith.minimumf %26, %33 : vector<128x128xf32>
    %35 = vector.extract_strided_slice %32 {offsets = [0, 128], sizes = [128, 128], strides = [1, 1]} : vector<128x256xf32> to vector<128x128xf32>
    %36 = arith.minimumf %34, %35 : vector<128x128xf32>
    %cst_30 = arith.constant dense<0x7F800000> : vector<256xf32>
    %37 = vector.multi_reduction <minimumf>, %32, %cst_30 [0] : vector<128x256xf32> to vector<256xf32>
    %38 = vector.shape_cast %37 : vector<256xf32> to vector<1x256xf32>
    %c0_31 = arith.constant 0 : index
    %c256_32 = arith.constant 256 : index
    %39 = vector.load %arg6[%c0_31, %c256_32] : memref<1x2048xf32, #tpu.memory_space<vmem>>, vector<1x256xf32>
    %40 = arith.minimumf %39, %38 : vector<1x256xf32>
    %c0_33 = arith.constant 0 : index
    %c256_34 = arith.constant 256 : index
    %41 = vector.load %arg6[%c0_33, %c256_34] : memref<1x2048xf32, #tpu.memory_space<vmem>>, vector<1x256xf32>
    tpu.vector_store %arg6[%c0_33, %c256_34], %40 {strides = array<i32>} : memref<1x2048xf32, #tpu.memory_space<vmem>>, vector<1x256xf32>,
    %cst_35 = arith.constant dense<0.000000e+00> : vector<128x256xf32>
    %42 = tpu.matmul %20, %7, %cst_35 {dimension_numbers = #tpu.dot_dimension_numbers<[1], [0], [0], [1], [0, 0, 1, 1], [], []>} : vector<128x8xf32>, vector<8x256xf32>, vector<128x256xf32> -> vector<128x256xf32>
    %43 = vector.extract_strided_slice %42 {offsets = [0, 0], sizes = [128, 128], strides = [1, 1]} : vector<128x256xf32> to vector<128x128xf32>
    %44 = arith.minimumf %36, %43 : vector<128x128xf32>
    %45 = vector.extract_strided_slice %42 {offsets = [0, 128], sizes = [128, 128], strides = [1, 1]} : vector<128x256xf32> to vector<128x128xf32>
    %46 = arith.minimumf %44, %45 : vector<128x128xf32>
    %cst_36 = arith.constant dense<0x7F800000> : vector<256xf32>
    %47 = vector.multi_reduction <minimumf>, %42, %cst_36 [0] : vector<128x256xf32> to vector<256xf32>
    %48 = vector.shape_cast %47 : vector<256xf32> to vector<1x256xf32>
    %c0_37 = arith.constant 0 : index
    %c512_38 = arith.constant 512 : index
    %49 = vector.load %arg6[%c0_37, %c512_38] : memref<1x2048xf32, #tpu.memory_space<vmem>>, vector<1x256xf32>
    %50 = arith.minimumf %49, %48 : vector<1x256xf32>
    %c0_39 = arith.constant 0 : index
    %c512_40 = arith.constant 512 : index
    %51 = vector.load %arg6[%c0_39, %c512_40] : memref<1x2048xf32, #tpu.memory_space<vmem>>, vector<1x256xf32>
    tpu.vector_store %arg6[%c0_39, %c512_40], %50 {strides = array<i32>} : memref<1x2048xf32, #tpu.memory_space<vmem>>, vector<1x256xf32>,
    %cst_41 = arith.constant dense<0.000000e+00> : vector<128x256xf32>
    %52 = tpu.matmul %20, %9, %cst_41 {dimension_numbers = #tpu.dot_dimension_numbers<[1], [0], [0], [1], [0, 0, 1, 1], [], []>} : vector<128x8xf32>, vector<8x256xf32>, vector<128x256xf32> -> vector<128x256xf32>
    %53 = vector.extract_strided_slice %52 {offsets = [0, 0], sizes = [128, 128], strides = [1, 1]} : vector<128x256xf32> to vector<128x128xf32>
    %54 = arith.minimumf %46, %53 : vector<128x128xf32>
    %55 = vector.extract_strided_slice %52 {offsets = [0, 128], sizes = [128, 128], strides = [1, 1]} : vector<128x256xf32> to vector<128x128xf32>
    %56 = arith.minimumf %54, %55 : vector<128x128xf32>
    %cst_42 = arith.constant dense<0x7F800000> : vector<256xf32>
    %57 = vector.multi_reduction <minimumf>, %52, %cst_42 [0] : vector<128x256xf32> to vector<256xf32>
    %58 = vector.shape_cast %57 : vector<256xf32> to vector<1x256xf32>
    %c0_43 = arith.constant 0 : index
    %c768_44 = arith.constant 768 : index
    %59 = vector.load %arg6[%c0_43, %c768_44] : memref<1x2048xf32, #tpu.memory_space<vmem>>, vector<1x256xf32>
    %60 = arith.minimumf %59, %58 : vector<1x256xf32>
    %c0_45 = arith.constant 0 : index
    %c768_46 = arith.constant 768 : index
    %61 = vector.load %arg6[%c0_45, %c768_46] : memref<1x2048xf32, #tpu.memory_space<vmem>>, vector<1x256xf32>
    tpu.vector_store %arg6[%c0_45, %c768_46], %60 {strides = array<i32>} : memref<1x2048xf32, #tpu.memory_space<vmem>>, vector<1x256xf32>,
    %cst_47 = arith.constant dense<0.000000e+00> : vector<128x256xf32>
    %62 = tpu.matmul %20, %11, %cst_47 {dimension_numbers = #tpu.dot_dimension_numbers<[1], [0], [0], [1], [0, 0, 1, 1], [], []>} : vector<128x8xf32>, vector<8x256xf32>, vector<128x256xf32> -> vector<128x256xf32>
    %63 = vector.extract_strided_slice %62 {offsets = [0, 0], sizes = [128, 128], strides = [1, 1]} : vector<128x256xf32> to vector<128x128xf32>
    %64 = arith.minimumf %56, %63 : vector<128x128xf32>
    %65 = vector.extract_strided_slice %62 {offsets = [0, 128], sizes = [128, 128], strides = [1, 1]} : vector<128x256xf32> to vector<128x128xf32>
    %66 = arith.minimumf %64, %65 : vector<128x128xf32>
    %cst_48 = arith.constant dense<0x7F800000> : vector<256xf32>
    %67 = vector.multi_reduction <minimumf>, %62, %cst_48 [0] : vector<128x256xf32> to vector<256xf32>
    %68 = vector.shape_cast %67 : vector<256xf32> to vector<1x256xf32>
    %c0_49 = arith.constant 0 : index
    %c1024_50 = arith.constant 1024 : index
    %69 = vector.load %arg6[%c0_49, %c1024_50] : memref<1x2048xf32, #tpu.memory_space<vmem>>, vector<1x256xf32>
    %70 = arith.minimumf %69, %68 : vector<1x256xf32>
    %c0_51 = arith.constant 0 : index
    %c1024_52 = arith.constant 1024 : index
    %71 = vector.load %arg6[%c0_51, %c1024_52] : memref<1x2048xf32, #tpu.memory_space<vmem>>, vector<1x256xf32>
    tpu.vector_store %arg6[%c0_51, %c1024_52], %70 {strides = array<i32>} : memref<1x2048xf32, #tpu.memory_space<vmem>>, vector<1x256xf32>,
    %cst_53 = arith.constant dense<0.000000e+00> : vector<128x256xf32>
    %72 = tpu.matmul %20, %13, %cst_53 {dimension_numbers = #tpu.dot_dimension_numbers<[1], [0], [0], [1], [0, 0, 1, 1], [], []>} : vector<128x8xf32>, vector<8x256xf32>, vector<128x256xf32> -> vector<128x256xf32>
    %73 = vector.extract_strided_slice %72 {offsets = [0, 0], sizes = [128, 128], strides = [1, 1]} : vector<128x256xf32> to vector<128x128xf32>
    %74 = arith.minimumf %66, %73 : vector<128x128xf32>
    %75 = vector.extract_strided_slice %72 {offsets = [0, 128], sizes = [128, 128], strides = [1, 1]} : vector<128x256xf32> to vector<128x128xf32>
    %76 = arith.minimumf %74, %75 : vector<128x128xf32>
    %cst_54 = arith.constant dense<0x7F800000> : vector<256xf32>
    %77 = vector.multi_reduction <minimumf>, %72, %cst_54 [0] : vector<128x256xf32> to vector<256xf32>
    %78 = vector.shape_cast %77 : vector<256xf32> to vector<1x256xf32>
    %c0_55 = arith.constant 0 : index
    %c1280_56 = arith.constant 1280 : index
    %79 = vector.load %arg6[%c0_55, %c1280_56] : memref<1x2048xf32, #tpu.memory_space<vmem>>, vector<1x256xf32>
    %80 = arith.minimumf %79, %78 : vector<1x256xf32>
    %c0_57 = arith.constant 0 : index
    %c1280_58 = arith.constant 1280 : index
    %81 = vector.load %arg6[%c0_57, %c1280_58] : memref<1x2048xf32, #tpu.memory_space<vmem>>, vector<1x256xf32>
    tpu.vector_store %arg6[%c0_57, %c1280_58], %80 {strides = array<i32>} : memref<1x2048xf32, #tpu.memory_space<vmem>>, vector<1x256xf32>,
    %cst_59 = arith.constant dense<0.000000e+00> : vector<128x256xf32>
    %82 = tpu.matmul %20, %15, %cst_59 {dimension_numbers = #tpu.dot_dimension_numbers<[1], [0], [0], [1], [0, 0, 1, 1], [], []>} : vector<128x8xf32>, vector<8x256xf32>, vector<128x256xf32> -> vector<128x256xf32>
    %83 = vector.extract_strided_slice %82 {offsets = [0, 0], sizes = [128, 128], strides = [1, 1]} : vector<128x256xf32> to vector<128x128xf32>
    %84 = arith.minimumf %76, %83 : vector<128x128xf32>
    %85 = vector.extract_strided_slice %82 {offsets = [0, 128], sizes = [128, 128], strides = [1, 1]} : vector<128x256xf32> to vector<128x128xf32>
    %86 = arith.minimumf %84, %85 : vector<128x128xf32>
    %cst_60 = arith.constant dense<0x7F800000> : vector<256xf32>
    %87 = vector.multi_reduction <minimumf>, %82, %cst_60 [0] : vector<128x256xf32> to vector<256xf32>
    %88 = vector.shape_cast %87 : vector<256xf32> to vector<1x256xf32>
    %c0_61 = arith.constant 0 : index
    %c1536_62 = arith.constant 1536 : index
    %89 = vector.load %arg6[%c0_61, %c1536_62] : memref<1x2048xf32, #tpu.memory_space<vmem>>, vector<1x256xf32>
    %90 = arith.minimumf %89, %88 : vector<1x256xf32>
    %c0_63 = arith.constant 0 : index
    %c1536_64 = arith.constant 1536 : index
    %91 = vector.load %arg6[%c0_63, %c1536_64] : memref<1x2048xf32, #tpu.memory_space<vmem>>, vector<1x256xf32>
    tpu.vector_store %arg6[%c0_63, %c1536_64], %90 {strides = array<i32>} : memref<1x2048xf32, #tpu.memory_space<vmem>>, vector<1x256xf32>,
    %cst_65 = arith.constant dense<0.000000e+00> : vector<128x256xf32>
    %92 = tpu.matmul %20, %17, %cst_65 {dimension_numbers = #tpu.dot_dimension_numbers<[1], [0], [0], [1], [0, 0, 1, 1], [], []>} : vector<128x8xf32>, vector<8x256xf32>, vector<128x256xf32> -> vector<128x256xf32>
    %93 = vector.extract_strided_slice %92 {offsets = [0, 0], sizes = [128, 128], strides = [1, 1]} : vector<128x256xf32> to vector<128x128xf32>
    %94 = arith.minimumf %86, %93 : vector<128x128xf32>
    %95 = vector.extract_strided_slice %92 {offsets = [0, 128], sizes = [128, 128], strides = [1, 1]} : vector<128x256xf32> to vector<128x128xf32>
    %96 = arith.minimumf %94, %95 : vector<128x128xf32>
    %cst_66 = arith.constant dense<0x7F800000> : vector<256xf32>
    %97 = vector.multi_reduction <minimumf>, %92, %cst_66 [0] : vector<128x256xf32> to vector<256xf32>
    %98 = vector.shape_cast %97 : vector<256xf32> to vector<1x256xf32>
    %c0_67 = arith.constant 0 : index
    %c1792_68 = arith.constant 1792 : index
    %99 = vector.load %arg6[%c0_67, %c1792_68] : memref<1x2048xf32, #tpu.memory_space<vmem>>, vector<1x256xf32>
    %100 = arith.minimumf %99, %98 : vector<1x256xf32>
    %c0_69 = arith.constant 0 : index
    %c1792_70 = arith.constant 1792 : index
    %101 = vector.load %arg6[%c0_69, %c1792_70] : memref<1x2048xf32, #tpu.memory_space<vmem>>, vector<1x256xf32>
    tpu.vector_store %arg6[%c0_69, %c1792_70], %100 {strides = array<i32>} : memref<1x2048xf32, #tpu.memory_space<vmem>>, vector<1x256xf32>,
    %cst_71 = arith.constant dense<0x7F800000> : vector<128xf32>
    %102 = vector.multi_reduction <minimumf>, %96, %cst_71 [1] : vector<128x128xf32> to vector<128xf32>
    %103 = vector.shape_cast %102 : vector<128xf32> to vector<128x1xf32>
    %cst_72 = arith.constant 0.000000e+00 : f32
    %104 = vector.broadcast %cst_72 : f32 to vector<128x1xf32>
    %105 = arith.maximumf %103, %104 : vector<128x1xf32>
    %106 = math.sqrt %105 : vector<128x1xf32>
    %c128_i32 = arith.constant 128 : i32
    %107 = arith.muli %arg1, %c128_i32 : i32
    %c0_i32 = arith.constant 0 : i32
    %108 = arith.addi %107, %c0_i32 : i32
    %109 = tpu.iota {dimensions = array<i32: 0>} : vector<128x1xi32>
    %110 = vector.broadcast %108 : i32 to vector<128x1xi32>
    %111 = arith.addi %110, %109 : vector<128x1xi32>
    %c64_i32 = arith.constant 64 : i32
    %112 = vector.broadcast %c64_i32 : i32 to vector<128x1xi32>
    %113 = arith.cmpi slt, %111, %112 : vector<128x1xi32>
    %cst_73 = arith.constant 0.000000e+00 : f32
    %114 = vector.broadcast %cst_73 : f32 to vector<128x1xf32>
    %115 = arith.select %113, %106, %114 : vector<128x1xi1>, vector<128x1xf32>
    %cst_74 = arith.constant dense<0.000000e+00> : vector<1xf32>
    %116 = vector.multi_reduction <add>, %115, %cst_74 [0] : vector<128x1xf32> to vector<1xf32>
    %117 = vector.shape_cast %116 : vector<1xf32> to vector<1x1xf32>
    %118 = arith.addf %18, %117 : vector<1x1xf32>
    %119 = vector.shape_cast %118 : vector<1x1xf32> to vector<1x1x1x1xf32>
    %120 = vector.broadcast %119 : vector<1x1x1x1xf32> to vector<1x1x8x128xf32>
    %c0_75 = arith.constant 0 : index
    %c0_76 = arith.constant 0 : index
    %c0_77 = arith.constant 0 : index
    %c0_78 = arith.constant 0 : index
    %121 = vector.load %arg4[%c0_75, %c0_76, %c0_77, %c0_78] : memref<1x1x8x128xf32, #tpu.memory_space<vmem>>, vector<1x1x8x128xf32>
    tpu.vector_store %arg4[%c0_75, %c0_76, %c0_77, %c0_78], %120 {strides = array<i32>} : memref<1x1x8x128xf32, #tpu.memory_space<vmem>>, vector<1x1x8x128xf32>,
    %c0_79 = arith.constant 0 : index
    %c0_80 = arith.constant 0 : index
    %122 = vector.load %arg6[%c0_79, %c0_80] : memref<1x2048xf32, #tpu.memory_space<vmem>>, vector<1x2048xf32>
    %123 = vector.shape_cast %122 : vector<1x2048xf32> to vector<1x1x1x2048xf32>
    %124 = vector.broadcast %123 : vector<1x1x1x2048xf32> to vector<1x1x8x2048xf32>
    %c0_81 = arith.constant 0 : index
    %c0_82 = arith.constant 0 : index
    %c0_83 = arith.constant 0 : index
    %c0_84 = arith.constant 0 : index
    %125 = vector.load %arg5[%c0_81, %c0_82, %c0_83, %c0_84] : memref<1x1x8x2048xf32, #tpu.memory_space<vmem>>, vector<1x1x8x2048xf32>
    tpu.vector_store %arg5[%c0_81, %c0_82, %c0_83, %c0_84], %124 {strides = array<i32>} : memref<1x1x8x2048xf32, #tpu.memory_space<vmem>>, vector<1x1x8x2048xf32>,
    return
  }
  func.func @transform_0(%arg0: i32, %arg1: i32) -> (i32, i32, i32) {
    %c0_i32 = arith.constant 0 : i32
    %c0_i32_0 = arith.constant 0 : i32
    return %arg0, %arg1, %c0_i32 : i32, i32, i32
  }
  func.func @transform_1(%arg0: i32, %arg1: i32) -> (i32, i32, i32) {
    %c0_i32 = arith.constant 0 : i32
    %c0_i32_0 = arith.constant 0 : i32
    %c0_i32_1 = arith.constant 0 : i32
    return %arg0, %c0_i32, %c0_i32_0 : i32, i32, i32
  }
  func.func @transform_2(%arg0: i32, %arg1: i32) -> (i32, i32, i32, i32) {
    %c0_i32 = arith.constant 0 : i32
    %c0_i32_0 = arith.constant 0 : i32
    %c0_i32_1 = arith.constant 0 : i32
    return %arg0, %arg1, %c0_i32, %c0_i32_0 : i32, i32, i32, i32
  }
  func.func @transform_3(%arg0: i32, %arg1: i32) -> (i32, i32, i32, i32) {
    %c0_i32 = arith.constant 0 : i32
    %c0_i32_0 = arith.constant 0 : i32
    %c0_i32_1 = arith.constant 0 : i32
    return %arg0, %arg1, %c0_i32, %c0_i32_0 : i32, i32, i32, i32
  }
}

</mosaic_0001>

<llo_original>
// kernel: tpu_custom_call.1
$region0: #{tpu_custom_call.1}
  #allocation0 [shape = 'u32[]', space=smem, size = 0x4, offset = 0x4, fixed_abs, tag = 'smem constant byte address 0x4 - core index']
  #allocation1 [shape = 'u32[72,128]{1,0:T(1,128)}', space=vmem, size = 0x9000, scoped, tag = 'internal scratch']
  #allocation2 [shape = 'f32[1,2048]{1,0:T(1,128)}', space=vmem, size = 0x2000, scoped, tag = 'scratch operand']
  %s0 = inlined_call_operand.vmem [shape: f32[2,256,8], index: 0, kind: input, shape index: {}]
  %s1 = inlined_call_operand.vmem [shape: f32[2,8,2048], index: 1, kind: input, shape index: {}]
  %s2 = inlined_call_operand.hbm [shape: f32[2,2,8,128], index: 2, kind: output, shape index: {0}]
  %s3 = inlined_call_operand.hbm [shape: f32[2,2,8,2048], index: 3, kind: output, shape index: {1}]
  %4 = xla_tuple %s2, %s3
  %s5 = sld [smem:[#allocation0]]
  $region49: #{tpu_custom_call.1} parent=0
    _
  %s7 = ssub.s32 1, %s5
  %s8 = scalar_select 0, %s7, %s5
  $region1: #{tpu_custom_call.1} parent=0
    #allocation3 [shape = 'u8[8192]{0}', space=vmem, size = 0x2000, scoped, tag = 'output window, operand 0']
    #allocation4 [shape = 's32[2]{0}', space=sflag, size = 0x8, scoped, tag = 'scoped memory for tpu_custom_call.1']
    #allocation5 [shape = 'u8[131072]{0}', space=vmem, size = 0x20000, scoped, tag = 'output window, operand 1']
    #allocation6 [shape = 's32[2]{0}', space=sflag, size = 0x8, scoped, tag = 'scoped memory for tpu_custom_call.1']
    %9 = vsyncpa [#allocation4], 0
    %s10 = scalar_lea.sflag [#allocation4], 1
    %11 = vsyncpa %s10, 0
    %12 = vsyncpa [#allocation6], 0
    %s13 = scalar_lea.sflag [#allocation6], 1
    %14 = vsyncpa %s13, 0
    loop: start=0, step=1, limit=6
    $region2: #{tpu_custom_call.1} parent=1 // loop_pre_header
      _
    $region3: #{tpu_custom_call.1} parent=1 // loop_header
      %s16 = sphi 0, %s20
      %p17 = scmp.ge.s32.totalorder %s16, 6
      %s23 = sphi 0, %s35
      %s24 = sphi 0, %s31
      %s25 = sphi 0, %s23
      %s26 = sphi 0, %s24
      %s27 = sphi 0, %s25
      %s28 = sphi 0, %s26
      %s40 = sphi 0, %s42
      %s43 = sphi 0, %s40
      %s44 = sphi 0, %s43
      %s60 = sphi 0, %s44
      %s66 = sphi 0, %s68
      %s69 = sphi 0, %s66
      %s70 = sphi 0, %s69
      %s86 = sphi 0, %s70
      %s94 = sphi 0, %s96
      %s97 = sphi 0, %s94
      %s98 = sphi 0, %s97
      %s114 = sphi 0, %s98
      %s122 = sphi 0, %s124
      %s125 = sphi 0, %s122
      %s126 = sphi 0, %s125
      %s142 = sphi 0, %s126
    $region4: #{tpu_custom_call.1} parent=1 // loop_header_branch
      %19 = sbr.rel (%p17) target = $region8
    $region5: #{tpu_custom_call.1} parent=1 // loop_body
      %s21 = ssub.s32 %s16, 1
      %s22 = ssub.s32 %s16, 2
      %s29 = sadd.s32 1, %s24
      %p30 = scmp.ge.s32.totalorder %s29, 2
      %s31 = scalar_select %p30, 0, %s29
      %s32 = sadd.s32 1, %s23
      %s33 = scalar_select %p30, %s32, %s23
      %p34 = scmp.ge.s32.totalorder %s33, 2
      %s35 = scalar_select %p34, 0, %s33
      %s36 = ssub.s32 %s23, %s35
      %s37 = ssub.s32 %s24, %s31
      %s38 = sor.u32 %s36, %s37
      %p39 = scmp.eq.s32.totalorder %s38, 0
      %s41 = sadd.s32 %s40, 1
      %s42 = scalar_select %p39, %s40, %s41
      %p45 = pneg %p39
      %p46 = scmp.eq.s32.totalorder %s16, 3
      %p47 = por %p45, %p46
      %p48 = scmp.ne.s32.totalorder %s40, %s43
      %p49 = scmp.eq.s32.totalorder %s16, 0
      %p50 = por %p48, %p49
      %p51 = scmp.ne.s32.totalorder %s40, %s43
      %p52 = scmp.eq.s32.totalorder %s21, 3
      %p53 = por %p51, %p52
      %p54 = scmp.ne.s32.totalorder %s43, %s44
      %p55 = scmp.eq.s32.totalorder %s21, 0
      %p56 = por %p54, %p55
      %p57 = scmp.ne.s32.totalorder %s43, %s44
      %p58 = scmp.eq.s32.totalorder %s22, 3
      %p59 = por %p57, %p58
      %p61 = scmp.ne.s32.totalorder %s44, %s60
      %p62 = scmp.eq.s32.totalorder %s22, 0
      %p63 = por %p61, %p62
      %s64 = ssub.s32 %s23, %s35
      %p65 = scmp.eq.s32.totalorder %s64, 0
      %s67 = sadd.s32 %s66, 1
      %s68 = scalar_select %p65, %s66, %s67
      %p71 = pneg %p65
      %p72 = scmp.eq.s32.totalorder %s16, 3
      %p73 = por %p71, %p72
      %p74 = scmp.ne.s32.totalorder %s66, %s69
      %p75 = scmp.eq.s32.totalorder %s16, 0
      %p76 = por %p74, %p75
      %p77 = scmp.ne.s32.totalorder %s66, %s69
      %p78 = scmp.eq.s32.totalorder %s21, 3
      %p79 = por %p77, %p78
      %p80 = scmp.ne.s32.totalorder %s69, %s70
      %p81 = scmp.eq.s32.totalorder %s21, 0
      %p82 = por %p80, %p81
      %p83 = scmp.ne.s32.totalorder %s69, %s70
      %p84 = scmp.eq.s32.totalorder %s22, 3
      %p85 = por %p83, %p84
      %p87 = scmp.ne.s32.totalorder %s70, %s86
      %p88 = scmp.eq.s32.totalorder %s22, 0
      %p89 = por %p87, %p88
      %s90 = ssub.s32 %s23, %s35
      %s91 = ssub.s32 %s24, %s31
      %s92 = sor.u32 %s90, %s91
      %p93 = scmp.eq.s32.totalorder %s92, 0
      %s95 = sadd.s32 %s94, 1
      %s96 = scalar_select %p93, %s94, %s95
      %p99 = pneg %p93
      %p100 = scmp.eq.s32.totalorder %s16, 3
      %p101 = por %p99, %p100
      %p102 = scmp.ne.s32.totalorder %s94, %s97
      %p103 = scmp.eq.s32.totalorder %s16, 0
      %p104 = por %p102, %p103
      %p105 = scmp.ne.s32.totalorder %s94, %s97
      %p106 = scmp.eq.s32.totalorder %s21, 3
      %p107 = por %p105, %p106
      %p108 = scmp.ne.s32.totalorder %s97, %s98
      %p109 = scmp.eq.s32.totalorder %s21, 0
      %p110 = por %p108, %p109
      %p111 = scmp.ne.s32.totalorder %s97, %s98
      %p112 = scmp.eq.s32.totalorder %s22, 3
      %p113 = por %p111, %p112
      %p115 = scmp.ne.s32.totalorder %s98, %s114
      %p116 = scmp.eq.s32.totalorder %s22, 0
      %p117 = por %p115, %p116
      %s118 = ssub.s32 %s23, %s35
      %s119 = ssub.s32 %s24, %s31
      %s120 = sor.u32 %s118, %s119
      %p121 = scmp.eq.s32.totalorder %s120, 0
      %s123 = sadd.s32 %s122, 1
      %s124 = scalar_select %p121, %s122, %s123
      %p127 = pneg %p121
      %p128 = scmp.eq.s32.totalorder %s16, 3
      %p129 = por %p127, %p128
      %p130 = scmp.ne.s32.totalorder %s122, %s125
      %p131 = scmp.eq.s32.totalorder %s16, 0
      %p132 = por %p130, %p131
      %p133 = scmp.ne.s32.totalorder %s122, %s125
      %p134 = scmp.eq.s32.totalorder %s21, 3
      %p135 = por %p133, %p134
      %p136 = scmp.ne.s32.totalorder %s125, %s126
      %p137 = scmp.eq.s32.totalorder %s21, 0
      %p138 = por %p136, %p137
      %p139 = scmp.ne.s32.totalorder %s125, %s126
      %p140 = scmp.eq.s32.totalorder %s22, 3
      %p141 = por %p139, %p140
      %p143 = scmp.ne.s32.totalorder %s126, %s142
      %p144 = scmp.eq.s32.totalorder %s22, 0
      %p145 = por %p143, %p144
      %p146 = scmp.le.s32.totalorder 1, %s16
      %p147 = scmp.lt.s32.totalorder %s16, 5
      %p148 = pnand %p146, %p147
      %p149 = pneg %p148
      // Predicated region
      $region9: #{tpu_custom_call.1} parent=5 // pred_check
        _
      $region10: #{tpu_custom_call.1} parent=5 // pred_check_branch
        %151 = sbr.rel (%p148) target = $region12
      $region11: #{tpu_custom_call.1} parent=5 // pred_region
        %s152 = ssub.s32 %s16, 1
      $region12: #{tpu_custom_call.1} parent=5 // pred_fallthru
        _
      %p153 = scmp.lt.s32.totalorder %s16, 4
      // Predicated region
      $region13: #{tpu_custom_call.1} parent=5 // pred_check
        %p154 = pneg %p153
      $region14: #{tpu_custom_call.1} parent=5 // pred_check_branch
        %156 = sbr.rel (%p154) target = $region16
      $region15: #{tpu_custom_call.1} parent=5 // pred_region
        // Predicated region
        $region17: #{tpu_custom_call.1} parent=15 // pred_check
          %p157 = pneg %p50
        $region18: #{tpu_custom_call.1} parent=15 // pred_check_branch
          %159 = sbr.rel (%p157) target = $region20
        $region19: #{tpu_custom_call.1} parent=15 // pred_region
          %s160 = smul.u32 16, %s24
          %p161 = scmp.lt.s32.totalorder %s23, 1
          %s162 = scalar_select %p161, %s23, 1
          %p163 = scmp.lt.s32.totalorder %s160, 31
          %s164 = scalar_select %p163, %s160, 31
          %s165 = smul.addr %s162, 32
          %s166 = sadd.s32 %s164, %s165
          %s167 = smul.addr %s166, 8
          %s168 = scalar_lea.vmem %s0, %s167
          %s169 = smul.u32 16, %s24
        $region20: #{tpu_custom_call.1} parent=15 // pred_fallthru
          _
        // Predicated region
        $region21: #{tpu_custom_call.1} parent=15 // pred_check
          %p170 = pneg %p76
        $region22: #{tpu_custom_call.1} parent=15 // pred_check_branch
          %172 = sbr.rel (%p170) target = $region24
        $region23: #{tpu_custom_call.1} parent=15 // pred_region
          %p173 = scmp.lt.s32.totalorder %s23, 1
          %s174 = scalar_select %p173, %s23, 1
          %s175 = smul.addr %s174, 16
          %s176 = smul.addr %s175, 8
          %s177 = scalar_lea.vmem %s1, %s176
        $region24: #{tpu_custom_call.1} parent=15 // pred_fallthru
          _
      $region16: #{tpu_custom_call.1} parent=5 // pred_fallthru
        _
      %p178 = scmp.le.s32.totalorder 1, %s16
      %p179 = scmp.lt.s32.totalorder %s16, 5
      %p180 = pnand %p178, %p179
      %p181 = pneg %p180
      // Predicated region
      $region25: #{tpu_custom_call.1} parent=5 // pred_check
        _
      $region26: #{tpu_custom_call.1} parent=5 // pred_check_branch
        %183 = sbr.rel (%p180) target = $region28
      $region27: #{tpu_custom_call.1} parent=5 // pred_region
        %s184 = ssub.s32 %s16, 1
        %s185 = smul.u32 16, %s26
        %p186 = scmp.lt.s32.totalorder %s25, 1
        %s187 = scalar_select %p186, %s25, 1
        %p188 = scmp.lt.s32.totalorder %s185, 31
        %s189 = scalar_select %p188, %s185, 31
        %s190 = smul.addr %s187, 32
        %s191 = sadd.s32 %s189, %s190
        %s192 = smul.addr %s191, 8
        %s193 = scalar_lea.vmem %s0, %s192
        %p194 = pneg %p56
        %p195 = pneg %p53
        %p196 = scmp.lt.s32.totalorder %s25, 1
        %s197 = scalar_select %p196, %s25, 1
        %s198 = smul.addr %s197, 16
        %s199 = smul.addr %s198, 8
        %s200 = scalar_lea.vmem %s1, %s199
        %p201 = pneg %p82
        %p202 = pneg %p79
        %p203 = pneg %p110
        %p204 = pneg %p107
        %s205 = sand.u32 %s97, 1
        %s206 = scalar_lea.sflag [#allocation4], %s205
        %s207 = sand.u32 %s97, 1
        %s208 = smul.addr %s207, 8
        %s209 = scalar_lea.vmem [#allocation3], %s208
        %p210 = pneg %p138
        %p211 = pneg %p135
        %s212 = sand.u32 %s125, 1
        %s213 = scalar_lea.sflag [#allocation6], %s212
        %s214 = sand.u32 %s125, 1
        %s215 = smul.addr %s214, 128
        %s216 = scalar_lea.vmem [#allocation5], %s215
        %s217 = smul.u32 16, %s26
        %p218 = scmp.lt.s32.totalorder %s25, 1
        %s219 = scalar_select %p218, %s25, 1
        %p220 = scmp.lt.s32.totalorder %s217, 31
        %s221 = scalar_select %p220, %s217, 31
        %s222 = smul.addr %s219, 32
        %s223 = sadd.s32 %s221, %s222
        %s224 = smul.addr %s223, 8
        %s225 = scalar_lea.vmem %s0, %s224
        %s226 = smul.u32 16, %s26
        %p227 = scmp.lt.s32.totalorder %s25, 1
        %s228 = scalar_select %p227, %s25, 1
        %s229 = smul.addr %s228, 16
        %s230 = smul.addr %s229, 8
        %s231 = scalar_lea.vmem %s1, %s230
        %232 = vst [vmem:[#allocation2] sm:$0xff] inf
        %233 = vst [vmem:[#allocation2 + $0x8] sm:$0xff] inf
        %v234 = vld [vmem:[%s231] sm:$0xff]
        %v235 = vld [vmem:[%s231 + $0x8] sm:$0xff]
        %v236 = vld [vmem:[%s231 + $0x10] sm:$0xff]
        %v237 = vld [vmem:[%s231 + $0x18] sm:$0xff]
        %v238 = vld [vmem:[%s231 + $0x20] sm:$0xff]
        %v239 = vld [vmem:[%s231 + $0x28] sm:$0xff]
        %v240 = vld [vmem:[%s231 + $0x30] sm:$0xff]
        %v241 = vld [vmem:[%s231 + $0x38] sm:$0xff]
        %v242 = vld [vmem:[%s231 + $0x40] sm:$0xff]
        %v243 = vld [vmem:[%s231 + $0x48] sm:$0xff]
        %v244 = vld [vmem:[%s231 + $0x50] sm:$0xff]
        %v245 = vld [vmem:[%s231 + $0x58] sm:$0xff]
        %v246 = vld [vmem:[%s231 + $0x60] sm:$0xff]
        %v247 = vld [vmem:[%s231 + $0x68] sm:$0xff]
        %v248 = vld [vmem:[%s231 + $0x70] sm:$0xff]
        %v249 = vld [vmem:[%s231 + $0x78] sm:$0xff]
        %v250 = vld [vmem:[%s225] sm:$0xff]
        %v251 = vld [vmem:[%s225 + $0x8] sm:$0xff]
        %v252 = vld [vmem:[%s225 + $0x10] sm:$0xff]
        %v253 = vld [vmem:[%s225 + $0x18] sm:$0xff]
        %v254 = vld [vmem:[%s225 + $0x20] sm:$0xff]
        %v255 = vld [vmem:[%s225 + $0x28] sm:$0xff]
        %v256 = vld [vmem:[%s225 + $0x30] sm:$0xff]
        %v257 = vld [vmem:[%s225 + $0x38] sm:$0xff]
        %v258 = vld [vmem:[%s225 + $0x40] sm:$0xff]
        %v259 = vld [vmem:[%s225 + $0x48] sm:$0xff]
        %v260 = vld [vmem:[%s225 + $0x50] sm:$0xff]
        %v261 = vld [vmem:[%s225 + $0x58] sm:$0xff]
        %v262 = vld [vmem:[%s225 + $0x60] sm:$0xff]
        %v263 = vld [vmem:[%s225 + $0x68] sm:$0xff]
        %v264 = vld [vmem:[%s225 + $0x70] sm:$0xff]
        %v265 = vld [vmem:[%s225 + $0x78] sm:$0xff]
        %vm266 = vcmask 64512
        %v268 = vsel %vm266, %v250, 0
        %v271 = vsel %vm266, %v251, 0
        %v274 = vsel %vm266, %v252, 0
        %v277 = vsel %vm266, %v253, 0
        %v280 = vsel %vm266, %v254, 0
        %v283 = vsel %vm266, %v255, 0
        %v286 = vsel %vm266, %v256, 0
        %v289 = vsel %vm266, %v257, 0
        %v292 = vsel %vm266, %v258, 0
        %v295 = vsel %vm266, %v259, 0
        %v298 = vsel %vm266, %v260, 0
        %v301 = vsel %vm266, %v261, 0
        %v304 = vsel %vm266, %v262, 0
        %v307 = vsel %vm266, %v263, 0
        %v310 = vsel %vm266, %v264, 0
        %v313 = vsel %vm266, %v265, 0
        %315 = vmatpush.msra.mxu0 0.0
        %316 = vmatpush.msra.mxu0 0.0
        %317 = vmatpush.msra.mxu0 0.0
        %318 = vmatpush.msra.mxu0 0.0
        %319 = vmatpush.msra.mxu0 0.0
        %320 = vmatpush.msra.mxu0 0.0
        %321 = vmatpush.msra.mxu0 0.0
        %322 = vmatpush.msra.mxu0 0.0
        %323 = vmatpush.msra.mxu0 0.0
        %324 = vmatpush.msra.mxu0 0.0
        %325 = vmatpush.msra.mxu0 0.0
        %326 = vmatpush.msra.mxu0 0.0
        %327 = vmatpush.msra.mxu0 0.0
        %328 = vmatpush.msra.mxu0 0.0
        %329 = vmatpush.msra.mxu0 0.0
        %330 = vmatpush.msra.mxu0 %v234
        %331 = vmatmul.f32.gmra.mxu0 %v268
        %v332 = vpop.f32.mrf.mxu0
        %v333 = vadd.f32 0.0, %v332
        %334 = vmatmul.f32.gmra.mxu0 %v271
        %v335 = vpop.f32.mrf.mxu0
        %v336 = vadd.f32 0.0, %v335
        %337 = vmatmul.f32.gmra.mxu0 %v274
        %v338 = vpop.f32.mrf.mxu0
        %v339 = vadd.f32 0.0, %v338
        %340 = vmatmul.f32.gmra.mxu0 %v277
        %v341 = vpop.f32.mrf.mxu0
        %v342 = vadd.f32 0.0, %v341
        %343 = vmatmul.f32.gmra.mxu0 %v280
        %v344 = vpop.f32.mrf.mxu0
        %v345 = vadd.f32 0.0, %v344
        %346 = vmatmul.f32.gmra.mxu0 %v283
        %v347 = vpop.f32.mrf.mxu0
        %v348 = vadd.f32 0.0, %v347
        %349 = vmatmul.f32.gmra.mxu0 %v286
        %v350 = vpop.f32.mrf.mxu0
        %v351 = vadd.f32 0.0, %v350
        %352 = vmatmul.f32.gmra.mxu0 %v289
        %v353 = vpop.f32.mrf.mxu0
        %v354 = vadd.f32 0.0, %v353
        %355 = vmatmul.f32.gmra.mxu0 %v292
        %v356 = vpop.f32.mrf.mxu0
        %v357 = vadd.f32 0.0, %v356
        %358 = vmatmul.f32.gmra.mxu0 %v295
        %v359 = vpop.f32.mrf.mxu0
        %v360 = vadd.f32 0.0, %v359
        %361 = vmatmul.f32.gmra.mxu0 %v298
        %v362 = vpop.f32.mrf.mxu0
        %v363 = vadd.f32 0.0, %v362
        %364 = vmatmul.f32.gmra.mxu0 %v301
        %v365 = vpop.f32.mrf.mxu0
        %v366 = vadd.f32 0.0, %v365
        %367 = vmatmul.f32.gmra.mxu0 %v304
        %v368 = vpop.f32.mrf.mxu0
        %v369 = vadd.f32 0.0, %v368
        %370 = vmatmul.f32.gmra.mxu0 %v307
        %v371 = vpop.f32.mrf.mxu0
        %v372 = vadd.f32 0.0, %v371
        %373 = vmatmul.f32.gmra.mxu0 %v310
        %v374 = vpop.f32.mrf.mxu0
        %v375 = vadd.f32 0.0, %v374
        %376 = vmatmul.f32.gmra.mxu0 %v313
        %v377 = vpop.f32.mrf.mxu0
        %v378 = vadd.f32 0.0, %v377
        %379 = vdwg.mxu0
        %380 = vmatpush.msra.mxu0 0.0
        %381 = vmatpush.msra.mxu0 0.0
        %382 = vmatpush.msra.mxu0 0.0
        %383 = vmatpush.msra.mxu0 0.0
        %384 = vmatpush.msra.mxu0 0.0
        %385 = vmatpush.msra.mxu0 0.0
        %386 = vmatpush.msra.mxu0 0.0
        %387 = vmatpush.msra.mxu0 0.0
        %388 = vmatpush.msra.mxu0 0.0
        %389 = vmatpush.msra.mxu0 0.0
        %390 = vmatpush.msra.mxu0 0.0
        %391 = vmatpush.msra.mxu0 0.0
        %392 = vmatpush.msra.mxu0 0.0
        %393 = vmatpush.msra.mxu0 0.0
        %394 = vmatpush.msra.mxu0 0.0
        %395 = vmatpush.msra.mxu0 %v235
        %396 = vmatmul.f32.gmra.mxu0 %v268
        %v397 = vpop.f32.mrf.mxu0
        %v398 = vadd.f32 0.0, %v397
        %399 = vmatmul.f32.gmra.mxu0 %v271
        %v400 = vpop.f32.mrf.mxu0
        %v401 = vadd.f32 0.0, %v400
        %402 = vmatmul.f32.gmra.mxu0 %v274
        %v403 = vpop.f32.mrf.mxu0
        %v404 = vadd.f32 0.0, %v403
        %405 = vmatmul.f32.gmra.mxu0 %v277
        %v406 = vpop.f32.mrf.mxu0
        %v407 = vadd.f32 0.0, %v406
        %408 = vmatmul.f32.gmra.mxu0 %v280
        %v409 = vpop.f32.mrf.mxu0
        %v410 = vadd.f32 0.0, %v409
        %411 = vmatmul.f32.gmra.mxu0 %v283
        %v412 = vpop.f32.mrf.mxu0
        %v413 = vadd.f32 0.0, %v412
        %414 = vmatmul.f32.gmra.mxu0 %v286
        %v415 = vpop.f32.mrf.mxu0
        %v416 = vadd.f32 0.0, %v415
        %417 = vmatmul.f32.gmra.mxu0 %v289
        %v418 = vpop.f32.mrf.mxu0
        %v419 = vadd.f32 0.0, %v418
        %420 = vmatmul.f32.gmra.mxu0 %v292
        %v421 = vpop.f32.mrf.mxu0
        %v422 = vadd.f32 0.0, %v421
        %423 = vmatmul.f32.gmra.mxu0 %v295
        %v424 = vpop.f32.mrf.mxu0
        %v425 = vadd.f32 0.0, %v424
        %426 = vmatmul.f32.gmra.mxu0 %v298
        %v427 = vpop.f32.mrf.mxu0
        %v428 = vadd.f32 0.0, %v427
        %429 = vmatmul.f32.gmra.mxu0 %v301
        %v430 = vpop.f32.mrf.mxu0
        %v431 = vadd.f32 0.0, %v430
        %432 = vmatmul.f32.gmra.mxu0 %v304
        %v433 = vpop.f32.mrf.mxu0
        %v434 = vadd.f32 0.0, %v433
        %435 = vmatmul.f32.gmra.mxu0 %v307
        %v436 = vpop.f32.mrf.mxu0
        %v437 = vadd.f32 0.0, %v436
        %438 = vmatmul.f32.gmra.mxu0 %v310
        %v439 = vpop.f32.mrf.mxu0
        %v440 = vadd.f32 0.0, %v439
        %441 = vmatmul.f32.gmra.mxu0 %v313
        %v442 = vpop.f32.mrf.mxu0
        %v443 = vadd.f32 0.0, %v442
        %444 = vdwg.mxu0
        %v445 = vmin.f32 %v333, %v398
        %v446 = vmin.f32 %v336, %v401
        %v447 = vmin.f32 %v339, %v404
        %v448 = vmin.f32 %v342, %v407
        %v449 = vmin.f32 %v345, %v410
        %v450 = vmin.f32 %v348, %v413
        %v451 = vmin.f32 %v351, %v416
        %v452 = vmin.f32 %v354, %v419
        %v453 = vmin.f32 %v357, %v422
        %v454 = vmin.f32 %v360, %v425
        %v455 = vmin.f32 %v363, %v428
        %v456 = vmin.f32 %v366, %v431
        %v457 = vmin.f32 %v369, %v434
        %v458 = vmin.f32 %v372, %v437
        %v459 = vmin.f32 %v375, %v440
        %v460 = vmin.f32 %v378, %v443
        %v461 = vmin.f32 %v333, %v339
        %v462 = vmin.f32 %v336, %v342
        %v463 = vmin.f32 %v461, %v345
        %v464 = vmin.f32 %v462, %v348
        %v465 = vmin.f32 %v463, %v351
        %v466 = vmin.f32 %v464, %v354
        %v467 = vmin.f32 %v465, %v357
        %v468 = vmin.f32 %v466, %v360
        %v469 = vmin.f32 %v467, %v363
        %v470 = vmin.f32 %v468, %v366
        %v471 = vmin.f32 %v469, %v369
        %v472 = vmin.f32 %v470, %v372
        %v473 = vmin.f32 %v471, %v375
        %v474 = vmin.f32 %v472, %v378
        %v475 = vmin.f32 %v473, %v474
        %v476 = vrot.slane %v475, 4
        %v477 = vmin.f32 %v475, %v476
        %v478 = vrot.slane %v477, 2
        %v479 = vmin.f32 %v477, %v478
        %v480 = vrot.slane %v479, 1
        %v481 = vmin.f32 %v479, %v480
        %v482 = vmin.f32 %v398, %v404
        %v483 = vmin.f32 %v401, %v407
        %v484 = vmin.f32 %v482, %v410
        %v485 = vmin.f32 %v483, %v413
        %v486 = vmin.f32 %v484, %v416
        %v487 = vmin.f32 %v485, %v419
        %v488 = vmin.f32 %v486, %v422
        %v489 = vmin.f32 %v487, %v425
        %v490 = vmin.f32 %v488, %v428
        %v491 = vmin.f32 %v489, %v431
        %v492 = vmin.f32 %v490, %v434
        %v493 = vmin.f32 %v491, %v437
        %v494 = vmin.f32 %v492, %v440
        %v495 = vmin.f32 %v493, %v443
        %v496 = vmin.f32 %v494, %v495
        %v497 = vrot.slane %v496, 4
        %v498 = vmin.f32 %v496, %v497
        %v499 = vrot.slane %v498, 2
        %v500 = vmin.f32 %v498, %v499
        %v501 = vrot.slane %v500, 1
        %v502 = vmin.f32 %v500, %v501
        %v503 = vld [vmem:[#allocation2] sm:$0x3]
        %v506 = vrot.slane %v502, 7
        %vm507 = vcmask 1040384
        %v508 = vsel %vm507, %v481, %v506
        %v510 = vmin.f32 %v503, %v508
        %v511 = vlaneseq
        %vm512 = vcmp.ge.s32.totalorder %v511, 0
        %vm513 = vcmp.lt.s32.totalorder %v511, 256
        %vm514 = vmand %vm512, %vm513
        %515 = vst.msk [vmem:[#allocation2] sm:$0x3] %vm514, %v510
        %516 = vmatpush.msra.mxu0 0.0
        %517 = vmatpush.msra.mxu0 0.0
        %518 = vmatpush.msra.mxu0 0.0
        %519 = vmatpush.msra.mxu0 0.0
        %520 = vmatpush.msra.mxu0 0.0
        %521 = vmatpush.msra.mxu0 0.0
        %522 = vmatpush.msra.mxu0 0.0
        %523 = vmatpush.msra.mxu0 0.0
        %524 = vmatpush.msra.mxu0 0.0
        %525 = vmatpush.msra.mxu0 0.0
        %526 = vmatpush.msra.mxu0 0.0
        %527 = vmatpush.msra.mxu0 0.0
        %528 = vmatpush.msra.mxu0 0.0
        %529 = vmatpush.msra.mxu0 0.0
        %530 = vmatpush.msra.mxu0 0.0
        %531 = vmatpush.msra.mxu0 %v236
        %532 = vmatmul.f32.gmra.mxu0 %v268
        %v533 = vpop.f32.mrf.mxu0
        %v534 = vadd.f32 0.0, %v533
        %535 = vmatmul.f32.gmra.mxu0 %v271
        %v536 = vpop.f32.mrf.mxu0
        %v537 = vadd.f32 0.0, %v536
        %538 = vmatmul.f32.gmra.mxu0 %v274
        %v539 = vpop.f32.mrf.mxu0
        %v540 = vadd.f32 0.0, %v539
        %541 = vmatmul.f32.gmra.mxu0 %v277
        %v542 = vpop.f32.mrf.mxu0
        %v543 = vadd.f32 0.0, %v542
        %544 = vmatmul.f32.gmra.mxu0 %v280
        %v545 = vpop.f32.mrf.mxu0
        %v546 = vadd.f32 0.0, %v545
        %547 = vmatmul.f32.gmra.mxu0 %v283
        %v548 = vpop.f32.mrf.mxu0
        %v549 = vadd.f32 0.0, %v548
        %550 = vmatmul.f32.gmra.mxu0 %v286
        %v551 = vpop.f32.mrf.mxu0
        %v552 = vadd.f32 0.0, %v551
        %553 = vmatmul.f32.gmra.mxu0 %v289
        %v554 = vpop.f32.mrf.mxu0
        %v555 = vadd.f32 0.0, %v554
        %556 = vmatmul.f32.gmra.mxu0 %v292
        %v557 = vpop.f32.mrf.mxu0
        %v558 = vadd.f32 0.0, %v557
        %559 = vmatmul.f32.gmra.mxu0 %v295
        %v560 = vpop.f32.mrf.mxu0
        %v561 = vadd.f32 0.0, %v560
        %562 = vmatmul.f32.gmra.mxu0 %v298
        %v563 = vpop.f32.mrf.mxu0
        %v564 = vadd.f32 0.0, %v563
        %565 = vmatmul.f32.gmra.mxu0 %v301
        %v566 = vpop.f32.mrf.mxu0
        %v567 = vadd.f32 0.0, %v566
        %568 = vmatmul.f32.gmra.mxu0 %v304
        %v569 = vpop.f32.mrf.mxu0
        %v570 = vadd.f32 0.0, %v569
        %571 = vmatmul.f32.gmra.mxu0 %v307
        %v572 = vpop.f32.mrf.mxu0
        %v573 = vadd.f32 0.0, %v572
        %574 = vmatmul.f32.gmra.mxu0 %v310
        %v575 = vpop.f32.mrf.mxu0
        %v576 = vadd.f32 0.0, %v575
        %577 = vmatmul.f32.gmra.mxu0 %v313
        %v578 = vpop.f32.mrf.mxu0
        %v579 = vadd.f32 0.0, %v578
        %580 = vdwg.mxu0
        %581 = vmatpush.msra.mxu0 0.0
        %582 = vmatpush.msra.mxu0 0.0
        %583 = vmatpush.msra.mxu0 0.0
        %584 = vmatpush.msra.mxu0 0.0
        %585 = vmatpush.msra.mxu0 0.0
        %586 = vmatpush.msra.mxu0 0.0
        %587 = vmatpush.msra.mxu0 0.0
        %588 = vmatpush.msra.mxu0 0.0
        %589 = vmatpush.msra.mxu0 0.0
        %590 = vmatpush.msra.mxu0 0.0
        %591 = vmatpush.msra.mxu0 0.0
        %592 = vmatpush.msra.mxu0 0.0
        %593 = vmatpush.msra.mxu0 0.0
        %594 = vmatpush.msra.mxu0 0.0
        %595 = vmatpush.msra.mxu0 0.0
        %596 = vmatpush.msra.mxu0 %v237
        %597 = vmatmul.f32.gmra.mxu0 %v268
        %v598 = vpop.f32.mrf.mxu0
        %v599 = vadd.f32 0.0, %v598
        %600 = vmatmul.f32.gmra.mxu0 %v271
        %v601 = vpop.f32.mrf.mxu0
        %v602 = vadd.f32 0.0, %v601
        %603 = vmatmul.f32.gmra.mxu0 %v274
        %v604 = vpop.f32.mrf.mxu0
        %v605 = vadd.f32 0.0, %v604
        %606 = vmatmul.f32.gmra.mxu0 %v277
        %v607 = vpop.f32.mrf.mxu0
        %v608 = vadd.f32 0.0, %v607
        %609 = vmatmul.f32.gmra.mxu0 %v280
        %v610 = vpop.f32.mrf.mxu0
        %v611 = vadd.f32 0.0, %v610
        %612 = vmatmul.f32.gmra.mxu0 %v283
        %v613 = vpop.f32.mrf.mxu0
        %v614 = vadd.f32 0.0, %v613
        %615 = vmatmul.f32.gmra.mxu0 %v286
        %v616 = vpop.f32.mrf.mxu0
        %v617 = vadd.f32 0.0, %v616
        %618 = vmatmul.f32.gmra.mxu0 %v289
        %v619 = vpop.f32.mrf.mxu0
        %v620 = vadd.f32 0.0, %v619
        %621 = vmatmul.f32.gmra.mxu0 %v292
        %v622 = vpop.f32.mrf.mxu0
        %v623 = vadd.f32 0.0, %v622
        %624 = vmatmul.f32.gmra.mxu0 %v295
        %v625 = vpop.f32.mrf.mxu0
        %v626 = vadd.f32 0.0, %v625
        %627 = vmatmul.f32.gmra.mxu0 %v298
        %v628 = vpop.f32.mrf.mxu0
        %v629 = vadd.f32 0.0, %v628
        %630 = vmatmul.f32.gmra.mxu0 %v301
        %v631 = vpop.f32.mrf.mxu0
        %v632 = vadd.f32 0.0, %v631
        %633 = vmatmul.f32.gmra.mxu0 %v304
        %v634 = vpop.f32.mrf.mxu0
        %v635 = vadd.f32 0.0, %v634
        %636 = vmatmul.f32.gmra.mxu0 %v307
        %v637 = vpop.f32.mrf.mxu0
        %v638 = vadd.f32 0.0, %v637
        %639 = vmatmul.f32.gmra.mxu0 %v310
        %v640 = vpop.f32.mrf.mxu0
        %v641 = vadd.f32 0.0, %v640
        %642 = vmatmul.f32.gmra.mxu0 %v313
        %v643 = vpop.f32.mrf.mxu0
        %v644 = vadd.f32 0.0, %v643
        %645 = vdwg.mxu0
        %v646 = vmin.f32 %v445, %v534
        %v647 = vmin.f32 %v446, %v537
        %v648 = vmin.f32 %v447, %v540
        %v649 = vmin.f32 %v448, %v543
        %v650 = vmin.f32 %v449, %v546
        %v651 = vmin.f32 %v450, %v549
        %v652 = vmin.f32 %v451, %v552
        %v653 = vmin.f32 %v452, %v555
        %v654 = vmin.f32 %v453, %v558
        %v655 = vmin.f32 %v454, %v561
        %v656 = vmin.f32 %v455, %v564
        %v657 = vmin.f32 %v456, %v567
        %v658 = vmin.f32 %v457, %v570
        %v659 = vmin.f32 %v458, %v573
        %v660 = vmin.f32 %v459, %v576
        %v661 = vmin.f32 %v460, %v579
        %v662 = vmin.f32 %v646, %v599
        %v663 = vmin.f32 %v647, %v602
        %v664 = vmin.f32 %v648, %v605
        %v665 = vmin.f32 %v649, %v608
        %v666 = vmin.f32 %v650, %v611
        %v667 = vmin.f32 %v651, %v614
        %v668 = vmin.f32 %v652, %v617
        %v669 = vmin.f32 %v653, %v620
        %v670 = vmin.f32 %v654, %v623
        %v671 = vmin.f32 %v655, %v626
        %v672 = vmin.f32 %v656, %v629
        %v673 = vmin.f32 %v657, %v632
        %v674 = vmin.f32 %v658, %v635
        %v675 = vmin.f32 %v659, %v638
        %v676 = vmin.f32 %v660, %v641
        %v677 = vmin.f32 %v661, %v644
        %v678 = vmin.f32 %v534, %v540
        %v679 = vmin.f32 %v537, %v543
        %v680 = vmin.f32 %v678, %v546
        %v681 = vmin.f32 %v679, %v549
        %v682 = vmin.f32 %v680, %v552
        %v683 = vmin.f32 %v681, %v555
        %v684 = vmin.f32 %v682, %v558
        %v685 = vmin.f32 %v683, %v561
        %v686 = vmin.f32 %v684, %v564
        %v687 = vmin.f32 %v685, %v567
        %v688 = vmin.f32 %v686, %v570
        %v689 = vmin.f32 %v687, %v573
        %v690 = vmin.f32 %v688, %v576
        %v691 = vmin.f32 %v689, %v579
        %v692 = vmin.f32 %v690, %v691
        %v693 = vrot.slane %v692, 4
        %v694 = vmin.f32 %v692, %v693
        %v695 = vrot.slane %v694, 2
        %v696 = vmin.f32 %v694, %v695
        %v697 = vrot.slane %v696, 1
        %v698 = vmin.f32 %v696, %v697
        %v699 = vmin.f32 %v599, %v605
        %v700 = vmin.f32 %v602, %v608
        %v701 = vmin.f32 %v699, %v611
        %v702 = vmin.f32 %v700, %v614
        %v703 = vmin.f32 %v701, %v617
        %v704 = vmin.f32 %v702, %v620
        %v705 = vmin.f32 %v703, %v623
        %v706 = vmin.f32 %v704, %v626
        %v707 = vmin.f32 %v705, %v629
        %v708 = vmin.f32 %v706, %v632
        %v709 = vmin.f32 %v707, %v635
        %v710 = vmin.f32 %v708, %v638
        %v711 = vmin.f32 %v709, %v641
        %v712 = vmin.f32 %v710, %v644
        %v713 = vmin.f32 %v711, %v712
        %v714 = vrot.slane %v713, 4
        %v715 = vmin.f32 %v713, %v714
        %v716 = vrot.slane %v715, 2
        %v717 = vmin.f32 %v715, %v716
        %v718 = vrot.slane %v717, 1
        %v719 = vmin.f32 %v717, %v718
        %v720 = vld [vmem:[#allocation2 + $0x2] sm:$0x3]
        %v723 = vrot.slane %v719, 7
        %v724 = vsel %vm507, %v698, %v723
        %v726 = vmin.f32 %v720, %v724
        %727 = vst.msk [vmem:[#allocation2 + $0x2] sm:$0x3] %vm514, %v726
        %728 = vmatpush.msra.mxu0 0.0
        %729 = vmatpush.msra.mxu0 0.0
        %730 = vmatpush.msra.mxu0 0.0
        %731 = vmatpush.msra.mxu0 0.0
        %732 = vmatpush.msra.mxu0 0.0
        %733 = vmatpush.msra.mxu0 0.0
        %734 = vmatpush.msra.mxu0 0.0
        %735 = vmatpush.msra.mxu0 0.0
        %736 = vmatpush.msra.mxu0 0.0
        %737 = vmatpush.msra.mxu0 0.0
        %738 = vmatpush.msra.mxu0 0.0
        %739 = vmatpush.msra.mxu0 0.0
        %740 = vmatpush.msra.mxu0 0.0
        %741 = vmatpush.msra.mxu0 0.0
        %742 = vmatpush.msra.mxu0 0.0
        %743 = vmatpush.msra.mxu0 %v238
        %744 = vmatmul.f32.gmra.mxu0 %v268
        %v745 = vpop.f32.mrf.mxu0
        %v746 = vadd.f32 0.0, %v745
        %747 = vmatmul.f32.gmra.mxu0 %v271
        %v748 = vpop.f32.mrf.mxu0
        %v749 = vadd.f32 0.0, %v748
        %750 = vmatmul.f32.gmra.mxu0 %v274
        %v751 = vpop.f32.mrf.mxu0
        %v752 = vadd.f32 0.0, %v751
        %753 = vmatmul.f32.gmra.mxu0 %v277
        %v754 = vpop.f32.mrf.mxu0
        %v755 = vadd.f32 0.0, %v754
        %756 = vmatmul.f32.gmra.mxu0 %v280
        %v757 = vpop.f32.mrf.mxu0
        %v758 = vadd.f32 0.0, %v757
        %759 = vmatmul.f32.gmra.mxu0 %v283
        %v760 = vpop.f32.mrf.mxu0
        %v761 = vadd.f32 0.0, %v760
        %762 = vmatmul.f32.gmra.mxu0 %v286
        %v763 = vpop.f32.mrf.mxu0
        %v764 = vadd.f32 0.0, %v763
        %765 = vmatmul.f32.gmra.mxu0 %v289
        %v766 = vpop.f32.mrf.mxu0
        %v767 = vadd.f32 0.0, %v766
        %768 = vmatmul.f32.gmra.mxu0 %v292
        %v769 = vpop.f32.mrf.mxu0
        %v770 = vadd.f32 0.0, %v769
        %771 = vmatmul.f32.gmra.mxu0 %v295
        %v772 = vpop.f32.mrf.mxu0
        %v773 = vadd.f32 0.0, %v772
        %774 = vmatmul.f32.gmra.mxu0 %v298
        %v775 = vpop.f32.mrf.mxu0
        %v776 = vadd.f32 0.0, %v775
        %777 = vmatmul.f32.gmra.mxu0 %v301
        %v778 = vpop.f32.mrf.mxu0
        %v779 = vadd.f32 0.0, %v778
        %780 = vmatmul.f32.gmra.mxu0 %v304
        %v781 = vpop.f32.mrf.mxu0
        %v782 = vadd.f32 0.0, %v781
        %783 = vmatmul.f32.gmra.mxu0 %v307
        %v784 = vpop.f32.mrf.mxu0
        %v785 = vadd.f32 0.0, %v784
        %786 = vmatmul.f32.gmra.mxu0 %v310
        %v787 = vpop.f32.mrf.mxu0
        %v788 = vadd.f32 0.0, %v787
        %789 = vmatmul.f32.gmra.mxu0 %v313
        %v790 = vpop.f32.mrf.mxu0
        %v791 = vadd.f32 0.0, %v790
        %792 = vdwg.mxu0
        %793 = vmatpush.msra.mxu0 0.0
        %794 = vmatpush.msra.mxu0 0.0
        %795 = vmatpush.msra.mxu0 0.0
        %796 = vmatpush.msra.mxu0 0.0
        %797 = vmatpush.msra.mxu0 0.0
        %798 = vmatpush.msra.mxu0 0.0
        %799 = vmatpush.msra.mxu0 0.0
        %800 = vmatpush.msra.mxu0 0.0
        %801 = vmatpush.msra.mxu0 0.0
        %802 = vmatpush.msra.mxu0 0.0
        %803 = vmatpush.msra.mxu0 0.0
        %804 = vmatpush.msra.mxu0 0.0
        %805 = vmatpush.msra.mxu0 0.0
        %806 = vmatpush.msra.mxu0 0.0
        %807 = vmatpush.msra.mxu0 0.0
        %808 = vmatpush.msra.mxu0 %v239
        %809 = vmatmul.f32.gmra.mxu0 %v268
        %v810 = vpop.f32.mrf.mxu0
        %v811 = vadd.f32 0.0, %v810
        %812 = vmatmul.f32.gmra.mxu0 %v271
        %v813 = vpop.f32.mrf.mxu0
        %v814 = vadd.f32 0.0, %v813
        %815 = vmatmul.f32.gmra.mxu0 %v274
        %v816 = vpop.f32.mrf.mxu0
        %v817 = vadd.f32 0.0, %v816
        %818 = vmatmul.f32.gmra.mxu0 %v277
        %v819 = vpop.f32.mrf.mxu0
        %v820 = vadd.f32 0.0, %v819
        %821 = vmatmul.f32.gmra.mxu0 %v280
        %v822 = vpop.f32.mrf.mxu0
        %v823 = vadd.f32 0.0, %v822
        %824 = vmatmul.f32.gmra.mxu0 %v283
        %v825 = vpop.f32.mrf.mxu0
        %v826 = vadd.f32 0.0, %v825
        %827 = vmatmul.f32.gmra.mxu0 %v286
        %v828 = vpop.f32.mrf.mxu0
        %v829 = vadd.f32 0.0, %v828
        %830 = vmatmul.f32.gmra.mxu0 %v289
        %v831 = vpop.f32.mrf.mxu0
        %v832 = vadd.f32 0.0, %v831
        %833 = vmatmul.f32.gmra.mxu0 %v292
        %v834 = vpop.f32.mrf.mxu0
        %v835 = vadd.f32 0.0, %v834
        %836 = vmatmul.f32.gmra.mxu0 %v295
        %v837 = vpop.f32.mrf.mxu0
        %v838 = vadd.f32 0.0, %v837
        %839 = vmatmul.f32.gmra.mxu0 %v298
        %v840 = vpop.f32.mrf.mxu0
        %v841 = vadd.f32 0.0, %v840
        %842 = vmatmul.f32.gmra.mxu0 %v301
        %v843 = vpop.f32.mrf.mxu0
        %v844 = vadd.f32 0.0, %v843
        %845 = vmatmul.f32.gmra.mxu0 %v304
        %v846 = vpop.f32.mrf.mxu0
        %v847 = vadd.f32 0.0, %v846
        %848 = vmatmul.f32.gmra.mxu0 %v307
        %v849 = vpop.f32.mrf.mxu0
        %v850 = vadd.f32 0.0, %v849
        %851 = vmatmul.f32.gmra.mxu0 %v310
        %v852 = vpop.f32.mrf.mxu0
        %v853 = vadd.f32 0.0, %v852
        %854 = vmatmul.f32.gmra.mxu0 %v313
        %v855 = vpop.f32.mrf.mxu0
        %v856 = vadd.f32 0.0, %v855
        %857 = vdwg.mxu0
        %v858 = vmin.f32 %v662, %v746
        %v859 = vmin.f32 %v663, %v749
        %v860 = vmin.f32 %v664, %v752
        %v861 = vmin.f32 %v665, %v755
        %v862 = vmin.f32 %v666, %v758
        %v863 = vmin.f32 %v667, %v761
        %v864 = vmin.f32 %v668, %v764
        %v865 = vmin.f32 %v669, %v767
        %v866 = vmin.f32 %v670, %v770
        %v867 = vmin.f32 %v671, %v773
        %v868 = vmin.f32 %v672, %v776
        %v869 = vmin.f32 %v673, %v779
        %v870 = vmin.f32 %v674, %v782
        %v871 = vmin.f32 %v675, %v785
        %v872 = vmin.f32 %v676, %v788
        %v873 = vmin.f32 %v677, %v791
        %v874 = vmin.f32 %v858, %v811
        %v875 = vmin.f32 %v859, %v814
        %v876 = vmin.f32 %v860, %v817
        %v877 = vmin.f32 %v861, %v820
        %v878 = vmin.f32 %v862, %v823
        %v879 = vmin.f32 %v863, %v826
        %v880 = vmin.f32 %v864, %v829
        %v881 = vmin.f32 %v865, %v832
        %v882 = vmin.f32 %v866, %v835
        %v883 = vmin.f32 %v867, %v838
        %v884 = vmin.f32 %v868, %v841
        %v885 = vmin.f32 %v869, %v844
        %v886 = vmin.f32 %v870, %v847
        %v887 = vmin.f32 %v871, %v850
        %v888 = vmin.f32 %v872, %v853
        %v889 = vmin.f32 %v873, %v856
        %v890 = vmin.f32 %v746, %v752
        %v891 = vmin.f32 %v749, %v755
        %v892 = vmin.f32 %v890, %v758
        %v893 = vmin.f32 %v891, %v761
        %v894 = vmin.f32 %v892, %v764
        %v895 = vmin.f32 %v893, %v767
        %v896 = vmin.f32 %v894, %v770
        %v897 = vmin.f32 %v895, %v773
        %v898 = vmin.f32 %v896, %v776
        %v899 = vmin.f32 %v897, %v779
        %v900 = vmin.f32 %v898, %v782
        %v901 = vmin.f32 %v899, %v785
        %v902 = vmin.f32 %v900, %v788
        %v903 = vmin.f32 %v901, %v791
        %v904 = vmin.f32 %v902, %v903
        %v905 = vrot.slane %v904, 4
        %v906 = vmin.f32 %v904, %v905
        %v907 = vrot.slane %v906, 2
        %v908 = vmin.f32 %v906, %v907
        %v909 = vrot.slane %v908, 1
        %v910 = vmin.f32 %v908, %v909
        %v911 = vmin.f32 %v811, %v817
        %v912 = vmin.f32 %v814, %v820
        %v913 = vmin.f32 %v911, %v823
        %v914 = vmin.f32 %v912, %v826
        %v915 = vmin.f32 %v913, %v829
        %v916 = vmin.f32 %v914, %v832
        %v917 = vmin.f32 %v915, %v835
        %v918 = vmin.f32 %v916, %v838
        %v919 = vmin.f32 %v917, %v841
        %v920 = vmin.f32 %v918, %v844
        %v921 = vmin.f32 %v919, %v847
        %v922 = vmin.f32 %v920, %v850
        %v923 = vmin.f32 %v921, %v853
        %v924 = vmin.f32 %v922, %v856
        %v925 = vmin.f32 %v923, %v924
        %v926 = vrot.slane %v925, 4
        %v927 = vmin.f32 %v925, %v926
        %v928 = vrot.slane %v927, 2
        %v929 = vmin.f32 %v927, %v928
        %v930 = vrot.slane %v929, 1
        %v931 = vmin.f32 %v929, %v930
        %v932 = vld [vmem:[#allocation2 + $0x4] sm:$0x3]
        %v935 = vrot.slane %v931, 7
        %v936 = vsel %vm507, %v910, %v935
        %v938 = vmin.f32 %v932, %v936
        %939 = vst.msk [vmem:[#allocation2 + $0x4] sm:$0x3] %vm514, %v938
        %940 = vmatpush.msra.mxu0 0.0
        %941 = vmatpush.msra.mxu0 0.0
        %942 = vmatpush.msra.mxu0 0.0
        %943 = vmatpush.msra.mxu0 0.0
        %944 = vmatpush.msra.mxu0 0.0
        %945 = vmatpush.msra.mxu0 0.0
        %946 = vmatpush.msra.mxu0 0.0
        %947 = vmatpush.msra.mxu0 0.0
        %948 = vmatpush.msra.mxu0 0.0
        %949 = vmatpush.msra.mxu0 0.0
        %950 = vmatpush.msra.mxu0 0.0
        %951 = vmatpush.msra.mxu0 0.0
        %952 = vmatpush.msra.mxu0 0.0
        %953 = vmatpush.msra.mxu0 0.0
        %954 = vmatpush.msra.mxu0 0.0
        %955 = vmatpush.msra.mxu0 %v240
        %956 = vmatmul.f32.gmra.mxu0 %v268
        %v957 = vpop.f32.mrf.mxu0
        %v958 = vadd.f32 0.0, %v957
        %959 = vmatmul.f32.gmra.mxu0 %v271
        %v960 = vpop.f32.mrf.mxu0
        %v961 = vadd.f32 0.0, %v960
        %962 = vmatmul.f32.gmra.mxu0 %v274
        %v963 = vpop.f32.mrf.mxu0
        %v964 = vadd.f32 0.0, %v963
        %965 = vmatmul.f32.gmra.mxu0 %v277
        %v966 = vpop.f32.mrf.mxu0
        %v967 = vadd.f32 0.0, %v966
        %968 = vmatmul.f32.gmra.mxu0 %v280
        %v969 = vpop.f32.mrf.mxu0
        %v970 = vadd.f32 0.0, %v969
        %971 = vmatmul.f32.gmra.mxu0 %v283
        %v972 = vpop.f32.mrf.mxu0
        %v973 = vadd.f32 0.0, %v972
        %974 = vmatmul.f32.gmra.mxu0 %v286
        %v975 = vpop.f32.mrf.mxu0
        %v976 = vadd.f32 0.0, %v975
        %977 = vmatmul.f32.gmra.mxu0 %v289
        %v978 = vpop.f32.mrf.mxu0
        %v979 = vadd.f32 0.0, %v978
        %980 = vmatmul.f32.gmra.mxu0 %v292
        %v981 = vpop.f32.mrf.mxu0
        %v982 = vadd.f32 0.0, %v981
        %983 = vmatmul.f32.gmra.mxu0 %v295
        %v984 = vpop.f32.mrf.mxu0
        %v985 = vadd.f32 0.0, %v984
        %986 = vmatmul.f32.gmra.mxu0 %v298
        %v987 = vpop.f32.mrf.mxu0
        %v988 = vadd.f32 0.0, %v987
        %989 = vmatmul.f32.gmra.mxu0 %v301
        %v990 = vpop.f32.mrf.mxu0
        %v991 = vadd.f32 0.0, %v990
        %992 = vmatmul.f32.gmra.mxu0 %v304
        %v993 = vpop.f32.mrf.mxu0
        %v994 = vadd.f32 0.0, %v993
        %995 = vmatmul.f32.gmra.mxu0 %v307
        %v996 = vpop.f32.mrf.mxu0
        %v997 = vadd.f32 0.0, %v996
        %998 = vmatmul.f32.gmra.mxu0 %v310
        %v999 = vpop.f32.mrf.mxu0
        %v1000 = vadd.f32 0.0, %v999
        %1001 = vmatmul.f32.gmra.mxu0 %v313
        %v1002 = vpop.f32.mrf.mxu0
        %v1003 = vadd.f32 0.0, %v1002
        %1004 = vdwg.mxu0
        %1005 = vmatpush.msra.mxu0 0.0
        %1006 = vmatpush.msra.mxu0 0.0
        %1007 = vmatpush.msra.mxu0 0.0
        %1008 = vmatpush.msra.mxu0 0.0
        %1009 = vmatpush.msra.mxu0 0.0
        %1010 = vmatpush.msra.mxu0 0.0
        %1011 = vmatpush.msra.mxu0 0.0
        %1012 = vmatpush.msra.mxu0 0.0
        %1013 = vmatpush.msra.mxu0 0.0
        %1014 = vmatpush.msra.mxu0 0.0
        %1015 = vmatpush.msra.mxu0 0.0
        %1016 = vmatpush.msra.mxu0 0.0
        %1017 = vmatpush.msra.mxu0 0.0
        %1018 = vmatpush.msra.mxu0 0.0
        %1019 = vmatpush.msra.mxu0 0.0
        %1020 = vmatpush.msra.mxu0 %v241
        %1021 = vmatmul.f32.gmra.mxu0 %v268
        %v1022 = vpop.f32.mrf.mxu0
        %v1023 = vadd.f32 0.0, %v1022
        %1024 = vmatmul.f32.gmra.mxu0 %v271
        %v1025 = vpop.f32.mrf.mxu0
        %v1026 = vadd.f32 0.0, %v1025
        %1027 = vmatmul.f32.gmra.mxu0 %v274
        %v1028 = vpop.f32.mrf.mxu0
        %v1029 = vadd.f32 0.0, %v1028
        %1030 = vmatmul.f32.gmra.mxu0 %v277
        %v1031 = vpop.f32.mrf.mxu0
        %v1032 = vadd.f32 0.0, %v1031
        %1033 = vmatmul.f32.gmra.mxu0 %v280
        %v1034 = vpop.f32.mrf.mxu0
        %v1035 = vadd.f32 0.0, %v1034
        %1036 = vmatmul.f32.gmra.mxu0 %v283
        %v1037 = vpop.f32.mrf.mxu0
        %v1038 = vadd.f32 0.0, %v1037
        %1039 = vmatmul.f32.gmra.mxu0 %v286
        %v1040 = vpop.f32.mrf.mxu0
        %v1041 = vadd.f32 0.0, %v1040
        %1042 = vmatmul.f32.gmra.mxu0 %v289
        %v1043 = vpop.f32.mrf.mxu0
        %v1044 = vadd.f32 0.0, %v1043
        %1045 = vmatmul.f32.gmra.mxu0 %v292
        %v1046 = vpop.f32.mrf.mxu0
        %v1047 = vadd.f32 0.0, %v1046
        %1048 = vmatmul.f32.gmra.mxu0 %v295
        %v1049 = vpop.f32.mrf.mxu0
        %v1050 = vadd.f32 0.0, %v1049
        %1051 = vmatmul.f32.gmra.mxu0 %v298
        %v1052 = vpop.f32.mrf.mxu0
        %v1053 = vadd.f32 0.0, %v1052
        %1054 = vmatmul.f32.gmra.mxu0 %v301
        %v1055 = vpop.f32.mrf.mxu0
        %v1056 = vadd.f32 0.0, %v1055
        %1057 = vmatmul.f32.gmra.mxu0 %v304
        %v1058 = vpop.f32.mrf.mxu0
        %v1059 = vadd.f32 0.0, %v1058
        %1060 = vmatmul.f32.gmra.mxu0 %v307
        %v1061 = vpop.f32.mrf.mxu0
        %v1062 = vadd.f32 0.0, %v1061
        %1063 = vmatmul.f32.gmra.mxu0 %v310
        %v1064 = vpop.f32.mrf.mxu0
        %v1065 = vadd.f32 0.0, %v1064
        %1066 = vmatmul.f32.gmra.mxu0 %v313
        %v1067 = vpop.f32.mrf.mxu0
        %v1068 = vadd.f32 0.0, %v1067
        %1069 = vdwg.mxu0
        %v1070 = vmin.f32 %v874, %v958
        %v1071 = vmin.f32 %v875, %v961
        %v1072 = vmin.f32 %v876, %v964
        %v1073 = vmin.f32 %v877, %v967
        %v1074 = vmin.f32 %v878, %v970
        %v1075 = vmin.f32 %v879, %v973
        %v1076 = vmin.f32 %v880, %v976
        %v1077 = vmin.f32 %v881, %v979
        %v1078 = vmin.f32 %v882, %v982
        %v1079 = vmin.f32 %v883, %v985
        %v1080 = vmin.f32 %v884, %v988
        %v1081 = vmin.f32 %v885, %v991
        %v1082 = vmin.f32 %v886, %v994
        %v1083 = vmin.f32 %v887, %v997
        %v1084 = vmin.f32 %v888, %v1000
        %v1085 = vmin.f32 %v889, %v1003
        %v1086 = vmin.f32 %v1070, %v1023
        %v1087 = vmin.f32 %v1071, %v1026
        %v1088 = vmin.f32 %v1072, %v1029
        %v1089 = vmin.f32 %v1073, %v1032
        %v1090 = vmin.f32 %v1074, %v1035
        %v1091 = vmin.f32 %v1075, %v1038
        %v1092 = vmin.f32 %v1076, %v1041
        %v1093 = vmin.f32 %v1077, %v1044
        %v1094 = vmin.f32 %v1078, %v1047
        %v1095 = vmin.f32 %v1079, %v1050
        %v1096 = vmin.f32 %v1080, %v1053
        %v1097 = vmin.f32 %v1081, %v1056
        %v1098 = vmin.f32 %v1082, %v1059
        %v1099 = vmin.f32 %v1083, %v1062
        %v1100 = vmin.f32 %v1084, %v1065
        %v1101 = vmin.f32 %v1085, %v1068
        %v1102 = vmin.f32 %v958, %v964
        %v1103 = vmin.f32 %v961, %v967
        %v1104 = vmin.f32 %v1102, %v970
        %v1105 = vmin.f32 %v1103, %v973
        %v1106 = vmin.f32 %v1104, %v976
        %v1107 = vmin.f32 %v1105, %v979
        %v1108 = vmin.f32 %v1106, %v982
        %v1109 = vmin.f32 %v1107, %v985
        %v1110 = vmin.f32 %v1108, %v988
        %v1111 = vmin.f32 %v1109, %v991
        %v1112 = vmin.f32 %v1110, %v994
        %v1113 = vmin.f32 %v1111, %v997
        %v1114 = vmin.f32 %v1112, %v1000
        %v1115 = vmin.f32 %v1113, %v1003
        %v1116 = vmin.f32 %v1114, %v1115
        %v1117 = vrot.slane %v1116, 4
        %v1118 = vmin.f32 %v1116, %v1117
        %v1119 = vrot.slane %v1118, 2
        %v1120 = vmin.f32 %v1118, %v1119
        %v1121 = vrot.slane %v1120, 1
        %v1122 = vmin.f32 %v1120, %v1121
        %v1123 = vmin.f32 %v1023, %v1029
        %v1124 = vmin.f32 %v1026, %v1032
        %v1125 = vmin.f32 %v1123, %v1035
        %v1126 = vmin.f32 %v1124, %v1038
        %v1127 = vmin.f32 %v1125, %v1041
        %v1128 = vmin.f32 %v1126, %v1044
        %v1129 = vmin.f32 %v1127, %v1047
        %v1130 = vmin.f32 %v1128, %v1050
        %v1131 = vmin.f32 %v1129, %v1053
        %v1132 = vmin.f32 %v1130, %v1056
        %v1133 = vmin.f32 %v1131, %v1059
        %v1134 = vmin.f32 %v1132, %v1062
        %v1135 = vmin.f32 %v1133, %v1065
        %v1136 = vmin.f32 %v1134, %v1068
        %v1137 = vmin.f32 %v1135, %v1136
        %v1138 = vrot.slane %v1137, 4
        %v1139 = vmin.f32 %v1137, %v1138
        %v1140 = vrot.slane %v1139, 2
        %v1141 = vmin.f32 %v1139, %v1140
        %v1142 = vrot.slane %v1141, 1
        %v1143 = vmin.f32 %v1141, %v1142
        %v1144 = vld [vmem:[#allocation2 + $0x6] sm:$0x3]
        %v1147 = vrot.slane %v1143, 7
        %v1148 = vsel %vm507, %v1122, %v1147
        %v1150 = vmin.f32 %v1144, %v1148
        %1151 = vst.msk [vmem:[#allocation2 + $0x6] sm:$0x3] %vm514, %v1150
        %1152 = vmatpush.msra.mxu0 0.0
        %1153 = vmatpush.msra.mxu0 0.0
        %1154 = vmatpush.msra.mxu0 0.0
        %1155 = vmatpush.msra.mxu0 0.0
        %1156 = vmatpush.msra.mxu0 0.0
        %1157 = vmatpush.msra.mxu0 0.0
        %1158 = vmatpush.msra.mxu0 0.0
        %1159 = vmatpush.msra.mxu0 0.0
        %1160 = vmatpush.msra.mxu0 0.0
        %1161 = vmatpush.msra.mxu0 0.0
        %1162 = vmatpush.msra.mxu0 0.0
        %1163 = vmatpush.msra.mxu0 0.0
        %1164 = vmatpush.msra.mxu0 0.0
        %1165 = vmatpush.msra.mxu0 0.0
        %1166 = vmatpush.msra.mxu0 0.0
        %1167 = vmatpush.msra.mxu0 %v242
        %1168 = vmatmul.f32.gmra.mxu0 %v268
        %v1169 = vpop.f32.mrf.mxu0
        %v1170 = vadd.f32 0.0, %v1169
        %1171 = vmatmul.f32.gmra.mxu0 %v271
        %v1172 = vpop.f32.mrf.mxu0
        %v1173 = vadd.f32 0.0, %v1172
        %1174 = vmatmul.f32.gmra.mxu0 %v274
        %v1175 = vpop.f32.mrf.mxu0
        %v1176 = vadd.f32 0.0, %v1175
        %1177 = vmatmul.f32.gmra.mxu0 %v277
        %v1178 = vpop.f32.mrf.mxu0
        %v1179 = vadd.f32 0.0, %v1178
        %1180 = vmatmul.f32.gmra.mxu0 %v280
        %v1181 = vpop.f32.mrf.mxu0
        %v1182 = vadd.f32 0.0, %v1181
        %1183 = vmatmul.f32.gmra.mxu0 %v283
        %v1184 = vpop.f32.mrf.mxu0
        %v1185 = vadd.f32 0.0, %v1184
        %1186 = vmatmul.f32.gmra.mxu0 %v286
        %v1187 = vpop.f32.mrf.mxu0
        %v1188 = vadd.f32 0.0, %v1187
        %1189 = vmatmul.f32.gmra.mxu0 %v289
        %v1190 = vpop.f32.mrf.mxu0
        %v1191 = vadd.f32 0.0, %v1190
        %1192 = vmatmul.f32.gmra.mxu0 %v292
        %v1193 = vpop.f32.mrf.mxu0
        %v1194 = vadd.f32 0.0, %v1193
        %1195 = vmatmul.f32.gmra.mxu0 %v295
        %v1196 = vpop.f32.mrf.mxu0
        %v1197 = vadd.f32 0.0, %v1196
        %1198 = vmatmul.f32.gmra.mxu0 %v298
        %v1199 = vpop.f32.mrf.mxu0
        %v1200 = vadd.f32 0.0, %v1199
        %1201 = vmatmul.f32.gmra.mxu0 %v301
        %v1202 = vpop.f32.mrf.mxu0
        %v1203 = vadd.f32 0.0, %v1202
        %1204 = vmatmul.f32.gmra.mxu0 %v304
        %v1205 = vpop.f32.mrf.mxu0
        %v1206 = vadd.f32 0.0, %v1205
        %1207 = vmatmul.f32.gmra.mxu0 %v307
        %v1208 = vpop.f32.mrf.mxu0
        %v1209 = vadd.f32 0.0, %v1208
        %1210 = vmatmul.f32.gmra.mxu0 %v310
        %v1211 = vpop.f32.mrf.mxu0
        %v1212 = vadd.f32 0.0, %v1211
        %1213 = vmatmul.f32.gmra.mxu0 %v313
        %v1214 = vpop.f32.mrf.mxu0
        %v1215 = vadd.f32 0.0, %v1214
        %1216 = vdwg.mxu0
        %1217 = vmatpush.msra.mxu0 0.0
        %1218 = vmatpush.msra.mxu0 0.0
        %1219 = vmatpush.msra.mxu0 0.0
        %1220 = vmatpush.msra.mxu0 0.0
        %1221 = vmatpush.msra.mxu0 0.0
        %1222 = vmatpush.msra.mxu0 0.0
        %1223 = vmatpush.msra.mxu0 0.0
        %1224 = vmatpush.msra.mxu0 0.0
        %1225 = vmatpush.msra.mxu0 0.0
        %1226 = vmatpush.msra.mxu0 0.0
        %1227 = vmatpush.msra.mxu0 0.0
        %1228 = vmatpush.msra.mxu0 0.0
        %1229 = vmatpush.msra.mxu0 0.0
        %1230 = vmatpush.msra.mxu0 0.0
        %1231 = vmatpush.msra.mxu0 0.0
        %1232 = vmatpush.msra.mxu0 %v243
        %1233 = vmatmul.f32.gmra.mxu0 %v268
        %v1234 = vpop.f32.mrf.mxu0
        %v1235 = vadd.f32 0.0, %v1234
        %1236 = vmatmul.f32.gmra.mxu0 %v271
        %v1237 = vpop.f32.mrf.mxu0
        %v1238 = vadd.f32 0.0, %v1237
        %1239 = vmatmul.f32.gmra.mxu0 %v274
        %v1240 = vpop.f32.mrf.mxu0
        %v1241 = vadd.f32 0.0, %v1240
        %1242 = vmatmul.f32.gmra.mxu0 %v277
        %v1243 = vpop.f32.mrf.mxu0
        %v1244 = vadd.f32 0.0, %v1243
        %1245 = vmatmul.f32.gmra.mxu0 %v280
        %v1246 = vpop.f32.mrf.mxu0
        %v1247 = vadd.f32 0.0, %v1246
        %1248 = vmatmul.f32.gmra.mxu0 %v283
        %v1249 = vpop.f32.mrf.mxu0
        %v1250 = vadd.f32 0.0, %v1249
        %1251 = vmatmul.f32.gmra.mxu0 %v286
        %v1252 = vpop.f32.mrf.mxu0
        %v1253 = vadd.f32 0.0, %v1252
        %1254 = vmatmul.f32.gmra.mxu0 %v289
        %v1255 = vpop.f32.mrf.mxu0
        %v1256 = vadd.f32 0.0, %v1255
        %1257 = vmatmul.f32.gmra.mxu0 %v292
        %v1258 = vpop.f32.mrf.mxu0
        %v1259 = vadd.f32 0.0, %v1258
        %1260 = vmatmul.f32.gmra.mxu0 %v295
        %v1261 = vpop.f32.mrf.mxu0
        %v1262 = vadd.f32 0.0, %v1261
        %1263 = vmatmul.f32.gmra.mxu0 %v298
        %v1264 = vpop.f32.mrf.mxu0
        %v1265 = vadd.f32 0.0, %v1264
        %1266 = vmatmul.f32.gmra.mxu0 %v301
        %v1267 = vpop.f32.mrf.mxu0
        %v1268 = vadd.f32 0.0, %v1267
        %1269 = vmatmul.f32.gmra.mxu0 %v304
        %v1270 = vpop.f32.mrf.mxu0
        %v1271 = vadd.f32 0.0, %v1270
        %1272 = vmatmul.f32.gmra.mxu0 %v307
        %v1273 = vpop.f32.mrf.mxu0
        %v1274 = vadd.f32 0.0, %v1273
        %1275 = vmatmul.f32.gmra.mxu0 %v310
        %v1276 = vpop.f32.mrf.mxu0
        %v1277 = vadd.f32 0.0, %v1276
        %1278 = vmatmul.f32.gmra.mxu0 %v313
        %v1279 = vpop.f32.mrf.mxu0
        %v1280 = vadd.f32 0.0, %v1279
        %1281 = vdwg.mxu0
        %v1282 = vmin.f32 %v1086, %v1170
        %v1283 = vmin.f32 %v1087, %v1173
        %v1284 = vmin.f32 %v1088, %v1176
        %v1285 = vmin.f32 %v1089, %v1179
        %v1286 = vmin.f32 %v1090, %v1182
        %v1287 = vmin.f32 %v1091, %v1185
        %v1288 = vmin.f32 %v1092, %v1188
        %v1289 = vmin.f32 %v1093, %v1191
        %v1290 = vmin.f32 %v1094, %v1194
        %v1291 = vmin.f32 %v1095, %v1197
        %v1292 = vmin.f32 %v1096, %v1200
        %v1293 = vmin.f32 %v1097, %v1203
        %v1294 = vmin.f32 %v1098, %v1206
        %v1295 = vmin.f32 %v1099, %v1209
        %v1296 = vmin.f32 %v1100, %v1212
        %v1297 = vmin.f32 %v1101, %v1215
        %v1298 = vmin.f32 %v1282, %v1235
        %v1299 = vmin.f32 %v1283, %v1238
        %v1300 = vmin.f32 %v1284, %v1241
        %v1301 = vmin.f32 %v1285, %v1244
        %v1302 = vmin.f32 %v1286, %v1247
        %v1303 = vmin.f32 %v1287, %v1250
        %v1304 = vmin.f32 %v1288, %v1253
        %v1305 = vmin.f32 %v1289, %v1256
        %v1306 = vmin.f32 %v1290, %v1259
        %v1307 = vmin.f32 %v1291, %v1262
        %v1308 = vmin.f32 %v1292, %v1265
        %v1309 = vmin.f32 %v1293, %v1268
        %v1310 = vmin.f32 %v1294, %v1271
        %v1311 = vmin.f32 %v1295, %v1274
        %v1312 = vmin.f32 %v1296, %v1277
        %v1313 = vmin.f32 %v1297, %v1280
        %v1314 = vmin.f32 %v1170, %v1176
        %v1315 = vmin.f32 %v1173, %v1179
        %v1316 = vmin.f32 %v1314, %v1182
        %v1317 = vmin.f32 %v1315, %v1185
        %v1318 = vmin.f32 %v1316, %v1188
        %v1319 = vmin.f32 %v1317, %v1191
        %v1320 = vmin.f32 %v1318, %v1194
        %v1321 = vmin.f32 %v1319, %v1197
        %v1322 = vmin.f32 %v1320, %v1200
        %v1323 = vmin.f32 %v1321, %v1203
        %v1324 = vmin.f32 %v1322, %v1206
        %v1325 = vmin.f32 %v1323, %v1209
        %v1326 = vmin.f32 %v1324, %v1212
        %v1327 = vmin.f32 %v1325, %v1215
        %v1328 = vmin.f32 %v1326, %v1327
        %v1329 = vrot.slane %v1328, 4
        %v1330 = vmin.f32 %v1328, %v1329
        %v1331 = vrot.slane %v1330, 2
        %v1332 = vmin.f32 %v1330, %v1331
        %v1333 = vrot.slane %v1332, 1
        %v1334 = vmin.f32 %v1332, %v1333
        %v1335 = vmin.f32 %v1235, %v1241
        %v1336 = vmin.f32 %v1238, %v1244
        %v1337 = vmin.f32 %v1335, %v1247
        %v1338 = vmin.f32 %v1336, %v1250
        %v1339 = vmin.f32 %v1337, %v1253
        %v1340 = vmin.f32 %v1338, %v1256
        %v1341 = vmin.f32 %v1339, %v1259
        %v1342 = vmin.f32 %v1340, %v1262
        %v1343 = vmin.f32 %v1341, %v1265
        %v1344 = vmin.f32 %v1342, %v1268
        %v1345 = vmin.f32 %v1343, %v1271
        %v1346 = vmin.f32 %v1344, %v1274
        %v1347 = vmin.f32 %v1345, %v1277
        %v1348 = vmin.f32 %v1346, %v1280
        %v1349 = vmin.f32 %v1347, %v1348
        %v1350 = vrot.slane %v1349, 4
        %v1351 = vmin.f32 %v1349, %v1350
        %v1352 = vrot.slane %v1351, 2
        %v1353 = vmin.f32 %v1351, %v1352
        %v1354 = vrot.slane %v1353, 1
        %v1355 = vmin.f32 %v1353, %v1354
        %v1356 = vld [vmem:[#allocation2 + $0x8] sm:$0x3]
        %v1359 = vrot.slane %v1355, 7
        %v1360 = vsel %vm507, %v1334, %v1359
        %v1362 = vmin.f32 %v1356, %v1360
        %1363 = vst.msk [vmem:[#allocation2 + $0x8] sm:$0x3] %vm514, %v1362
        %1364 = vmatpush.msra.mxu0 0.0
        %1365 = vmatpush.msra.mxu0 0.0
        %1366 = vmatpush.msra.mxu0 0.0
        %1367 = vmatpush.msra.mxu0 0.0
        %1368 = vmatpush.msra.mxu0 0.0
        %1369 = vmatpush.msra.mxu0 0.0
        %1370 = vmatpush.msra.mxu0 0.0
        %1371 = vmatpush.msra.mxu0 0.0
        %1372 = vmatpush.msra.mxu0 0.0
        %1373 = vmatpush.msra.mxu0 0.0
        %1374 = vmatpush.msra.mxu0 0.0
        %1375 = vmatpush.msra.mxu0 0.0
        %1376 = vmatpush.msra.mxu0 0.0
        %1377 = vmatpush.msra.mxu0 0.0
        %1378 = vmatpush.msra.mxu0 0.0
        %1379 = vmatpush.msra.mxu0 %v244
        %1380 = vmatmul.f32.gmra.mxu0 %v268
        %v1381 = vpop.f32.mrf.mxu0
        %v1382 = vadd.f32 0.0, %v1381
        %1383 = vmatmul.f32.gmra.mxu0 %v271
        %v1384 = vpop.f32.mrf.mxu0
        %v1385 = vadd.f32 0.0, %v1384
        %1386 = vmatmul.f32.gmra.mxu0 %v274
        %v1387 = vpop.f32.mrf.mxu0
        %v1388 = vadd.f32 0.0, %v1387
        %1389 = vmatmul.f32.gmra.mxu0 %v277
        %v1390 = vpop.f32.mrf.mxu0
        %v1391 = vadd.f32 0.0, %v1390
        %1392 = vmatmul.f32.gmra.mxu0 %v280
        %v1393 = vpop.f32.mrf.mxu0
        %v1394 = vadd.f32 0.0, %v1393
        %1395 = vmatmul.f32.gmra.mxu0 %v283
        %v1396 = vpop.f32.mrf.mxu0
        %v1397 = vadd.f32 0.0, %v1396
        %1398 = vmatmul.f32.gmra.mxu0 %v286
        %v1399 = vpop.f32.mrf.mxu0
        %v1400 = vadd.f32 0.0, %v1399
        %1401 = vmatmul.f32.gmra.mxu0 %v289
        %v1402 = vpop.f32.mrf.mxu0
        %v1403 = vadd.f32 0.0, %v1402
        %1404 = vmatmul.f32.gmra.mxu0 %v292
        %v1405 = vpop.f32.mrf.mxu0
        %v1406 = vadd.f32 0.0, %v1405
        %1407 = vmatmul.f32.gmra.mxu0 %v295
        %v1408 = vpop.f32.mrf.mxu0
        %v1409 = vadd.f32 0.0, %v1408
        %1410 = vmatmul.f32.gmra.mxu0 %v298
        %v1411 = vpop.f32.mrf.mxu0
        %v1412 = vadd.f32 0.0, %v1411
        %1413 = vmatmul.f32.gmra.mxu0 %v301
        %v1414 = vpop.f32.mrf.mxu0
        %v1415 = vadd.f32 0.0, %v1414
        %1416 = vmatmul.f32.gmra.mxu0 %v304
        %v1417 = vpop.f32.mrf.mxu0
        %v1418 = vadd.f32 0.0, %v1417
        %1419 = vmatmul.f32.gmra.mxu0 %v307
        %v1420 = vpop.f32.mrf.mxu0
        %v1421 = vadd.f32 0.0, %v1420
        %1422 = vmatmul.f32.gmra.mxu0 %v310
        %v1423 = vpop.f32.mrf.mxu0
        %v1424 = vadd.f32 0.0, %v1423
        %1425 = vmatmul.f32.gmra.mxu0 %v313
        %v1426 = vpop.f32.mrf.mxu0
        %v1427 = vadd.f32 0.0, %v1426
        %1428 = vdwg.mxu0
        %1429 = vmatpush.msra.mxu0 0.0
        %1430 = vmatpush.msra.mxu0 0.0
        %1431 = vmatpush.msra.mxu0 0.0
        %1432 = vmatpush.msra.mxu0 0.0
        %1433 = vmatpush.msra.mxu0 0.0
        %1434 = vmatpush.msra.mxu0 0.0
        %1435 = vmatpush.msra.mxu0 0.0
        %1436 = vmatpush.msra.mxu0 0.0
        %1437 = vmatpush.msra.mxu0 0.0
        %1438 = vmatpush.msra.mxu0 0.0
        %1439 = vmatpush.msra.mxu0 0.0
        %1440 = vmatpush.msra.mxu0 0.0
        %1441 = vmatpush.msra.mxu0 0.0
        %1442 = vmatpush.msra.mxu0 0.0
        %1443 = vmatpush.msra.mxu0 0.0
        %1444 = vmatpush.msra.mxu0 %v245
        %1445 = vmatmul.f32.gmra.mxu0 %v268
        %v1446 = vpop.f32.mrf.mxu0
        %v1447 = vadd.f32 0.0, %v1446
        %1448 = vmatmul.f32.gmra.mxu0 %v271
        %v1449 = vpop.f32.mrf.mxu0
        %v1450 = vadd.f32 0.0, %v1449
        %1451 = vmatmul.f32.gmra.mxu0 %v274
        %v1452 = vpop.f32.mrf.mxu0
        %v1453 = vadd.f32 0.0, %v1452
        %1454 = vmatmul.f32.gmra.mxu0 %v277
        %v1455 = vpop.f32.mrf.mxu0
        %v1456 = vadd.f32 0.0, %v1455
        %1457 = vmatmul.f32.gmra.mxu0 %v280
        %v1458 = vpop.f32.mrf.mxu0
        %v1459 = vadd.f32 0.0, %v1458
        %1460 = vmatmul.f32.gmra.mxu0 %v283
        %v1461 = vpop.f32.mrf.mxu0
        %v1462 = vadd.f32 0.0, %v1461
        %1463 = vmatmul.f32.gmra.mxu0 %v286
        %v1464 = vpop.f32.mrf.mxu0
        %v1465 = vadd.f32 0.0, %v1464
        %1466 = vmatmul.f32.gmra.mxu0 %v289
        %v1467 = vpop.f32.mrf.mxu0
        %v1468 = vadd.f32 0.0, %v1467
        %1469 = vmatmul.f32.gmra.mxu0 %v292
        %v1470 = vpop.f32.mrf.mxu0
        %v1471 = vadd.f32 0.0, %v1470
        %1472 = vmatmul.f32.gmra.mxu0 %v295
        %v1473 = vpop.f32.mrf.mxu0
        %v1474 = vadd.f32 0.0, %v1473
        %1475 = vmatmul.f32.gmra.mxu0 %v298
        %v1476 = vpop.f32.mrf.mxu0
        %v1477 = vadd.f32 0.0, %v1476
        %1478 = vmatmul.f32.gmra.mxu0 %v301
        %v1479 = vpop.f32.mrf.mxu0
        %v1480 = vadd.f32 0.0, %v1479
        %1481 = vmatmul.f32.gmra.mxu0 %v304
        %v1482 = vpop.f32.mrf.mxu0
        %v1483 = vadd.f32 0.0, %v1482
        %1484 = vmatmul.f32.gmra.mxu0 %v307
        %v1485 = vpop.f32.mrf.mxu0
        %v1486 = vadd.f32 0.0, %v1485
        %1487 = vmatmul.f32.gmra.mxu0 %v310
        %v1488 = vpop.f32.mrf.mxu0
        %v1489 = vadd.f32 0.0, %v1488
        %1490 = vmatmul.f32.gmra.mxu0 %v313
        %v1491 = vpop.f32.mrf.mxu0
        %v1492 = vadd.f32 0.0, %v1491
        %1493 = vdwg.mxu0
        %v1494 = vmin.f32 %v1298, %v1382
        %v1495 = vmin.f32 %v1299, %v1385
        %v1496 = vmin.f32 %v1300, %v1388
        %v1497 = vmin.f32 %v1301, %v1391
        %v1498 = vmin.f32 %v1302, %v1394
        %v1499 = vmin.f32 %v1303, %v1397
        %v1500 = vmin.f32 %v1304, %v1400
        %v1501 = vmin.f32 %v1305, %v1403
        %v1502 = vmin.f32 %v1306, %v1406
        %v1503 = vmin.f32 %v1307, %v1409
        %v1504 = vmin.f32 %v1308, %v1412
        %v1505 = vmin.f32 %v1309, %v1415
        %v1506 = vmin.f32 %v1310, %v1418
        %v1507 = vmin.f32 %v1311, %v1421
        %v1508 = vmin.f32 %v1312, %v1424
        %v1509 = vmin.f32 %v1313, %v1427
        %v1510 = vmin.f32 %v1494, %v1447
        %v1511 = vmin.f32 %v1495, %v1450
        %v1512 = vmin.f32 %v1496, %v1453
        %v1513 = vmin.f32 %v1497, %v1456
        %v1514 = vmin.f32 %v1498, %v1459
        %v1515 = vmin.f32 %v1499, %v1462
        %v1516 = vmin.f32 %v1500, %v1465
        %v1517 = vmin.f32 %v1501, %v1468
        %v1518 = vmin.f32 %v1502, %v1471
        %v1519 = vmin.f32 %v1503, %v1474
        %v1520 = vmin.f32 %v1504, %v1477
        %v1521 = vmin.f32 %v1505, %v1480
        %v1522 = vmin.f32 %v1506, %v1483
        %v1523 = vmin.f32 %v1507, %v1486
        %v1524 = vmin.f32 %v1508, %v1489
        %v1525 = vmin.f32 %v1509, %v1492
        %v1526 = vmin.f32 %v1382, %v1388
        %v1527 = vmin.f32 %v1385, %v1391
        %v1528 = vmin.f32 %v1526, %v1394
        %v1529 = vmin.f32 %v1527, %v1397
        %v1530 = vmin.f32 %v1528, %v1400
        %v1531 = vmin.f32 %v1529, %v1403
        %v1532 = vmin.f32 %v1530, %v1406
        %v1533 = vmin.f32 %v1531, %v1409
        %v1534 = vmin.f32 %v1532, %v1412
        %v1535 = vmin.f32 %v1533, %v1415
        %v1536 = vmin.f32 %v1534, %v1418
        %v1537 = vmin.f32 %v1535, %v1421
        %v1538 = vmin.f32 %v1536, %v1424
        %v1539 = vmin.f32 %v1537, %v1427
        %v1540 = vmin.f32 %v1538, %v1539
        %v1541 = vrot.slane %v1540, 4
        %v1542 = vmin.f32 %v1540, %v1541
        %v1543 = vrot.slane %v1542, 2
        %v1544 = vmin.f32 %v1542, %v1543
        %v1545 = vrot.slane %v1544, 1
        %v1546 = vmin.f32 %v1544, %v1545
        %v1547 = vmin.f32 %v1447, %v1453
        %v1548 = vmin.f32 %v1450, %v1456
        %v1549 = vmin.f32 %v1547, %v1459
        %v1550 = vmin.f32 %v1548, %v1462
        %v1551 = vmin.f32 %v1549, %v1465
        %v1552 = vmin.f32 %v1550, %v1468
        %v1553 = vmin.f32 %v1551, %v1471
        %v1554 = vmin.f32 %v1552, %v1474
        %v1555 = vmin.f32 %v1553, %v1477
        %v1556 = vmin.f32 %v1554, %v1480
        %v1557 = vmin.f32 %v1555, %v1483
        %v1558 = vmin.f32 %v1556, %v1486
        %v1559 = vmin.f32 %v1557, %v1489
        %v1560 = vmin.f32 %v1558, %v1492
        %v1561 = vmin.f32 %v1559, %v1560
        %v1562 = vrot.slane %v1561, 4
        %v1563 = vmin.f32 %v1561, %v1562
        %v1564 = vrot.slane %v1563, 2
        %v1565 = vmin.f32 %v1563, %v1564
        %v1566 = vrot.slane %v1565, 1
        %v1567 = vmin.f32 %v1565, %v1566
        %v1568 = vld [vmem:[#allocation2 + $0xa] sm:$0x3]
        %v1571 = vrot.slane %v1567, 7
        %v1572 = vsel %vm507, %v1546, %v1571
        %v1574 = vmin.f32 %v1568, %v1572
        %1575 = vst.msk [vmem:[#allocation2 + $0xa] sm:$0x3] %vm514, %v1574
        %1576 = vmatpush.msra.mxu0 0.0
        %1577 = vmatpush.msra.mxu0 0.0
        %1578 = vmatpush.msra.mxu0 0.0
        %1579 = vmatpush.msra.mxu0 0.0
        %1580 = vmatpush.msra.mxu0 0.0
        %1581 = vmatpush.msra.mxu0 0.0
        %1582 = vmatpush.msra.mxu0 0.0
        %1583 = vmatpush.msra.mxu0 0.0
        %1584 = vmatpush.msra.mxu0 0.0
        %1585 = vmatpush.msra.mxu0 0.0
        %1586 = vmatpush.msra.mxu0 0.0
        %1587 = vmatpush.msra.mxu0 0.0
        %1588 = vmatpush.msra.mxu0 0.0
        %1589 = vmatpush.msra.mxu0 0.0
        %1590 = vmatpush.msra.mxu0 0.0
        %1591 = vmatpush.msra.mxu0 %v246
        %1592 = vmatmul.f32.gmra.mxu0 %v268
        %v1593 = vpop.f32.mrf.mxu0
        %v1594 = vadd.f32 0.0, %v1593
        %1595 = vmatmul.f32.gmra.mxu0 %v271
        %v1596 = vpop.f32.mrf.mxu0
        %v1597 = vadd.f32 0.0, %v1596
        %1598 = vmatmul.f32.gmra.mxu0 %v274
        %v1599 = vpop.f32.mrf.mxu0
        %v1600 = vadd.f32 0.0, %v1599
        %1601 = vmatmul.f32.gmra.mxu0 %v277
        %v1602 = vpop.f32.mrf.mxu0
        %v1603 = vadd.f32 0.0, %v1602
        %1604 = vmatmul.f32.gmra.mxu0 %v280
        %v1605 = vpop.f32.mrf.mxu0
        %v1606 = vadd.f32 0.0, %v1605
        %1607 = vmatmul.f32.gmra.mxu0 %v283
        %v1608 = vpop.f32.mrf.mxu0
        %v1609 = vadd.f32 0.0, %v1608
        %1610 = vmatmul.f32.gmra.mxu0 %v286
        %v1611 = vpop.f32.mrf.mxu0
        %v1612 = vadd.f32 0.0, %v1611
        %1613 = vmatmul.f32.gmra.mxu0 %v289
        %v1614 = vpop.f32.mrf.mxu0
        %v1615 = vadd.f32 0.0, %v1614
        %1616 = vmatmul.f32.gmra.mxu0 %v292
        %v1617 = vpop.f32.mrf.mxu0
        %v1618 = vadd.f32 0.0, %v1617
        %1619 = vmatmul.f32.gmra.mxu0 %v295
        %v1620 = vpop.f32.mrf.mxu0
        %v1621 = vadd.f32 0.0, %v1620
        %1622 = vmatmul.f32.gmra.mxu0 %v298
        %v1623 = vpop.f32.mrf.mxu0
        %v1624 = vadd.f32 0.0, %v1623
        %1625 = vmatmul.f32.gmra.mxu0 %v301
        %v1626 = vpop.f32.mrf.mxu0
        %v1627 = vadd.f32 0.0, %v1626
        %1628 = vmatmul.f32.gmra.mxu0 %v304
        %v1629 = vpop.f32.mrf.mxu0
        %v1630 = vadd.f32 0.0, %v1629
        %1631 = vmatmul.f32.gmra.mxu0 %v307
        %v1632 = vpop.f32.mrf.mxu0
        %v1633 = vadd.f32 0.0, %v1632
        %1634 = vmatmul.f32.gmra.mxu0 %v310
        %v1635 = vpop.f32.mrf.mxu0
        %v1636 = vadd.f32 0.0, %v1635
        %1637 = vmatmul.f32.gmra.mxu0 %v313
        %v1638 = vpop.f32.mrf.mxu0
        %v1639 = vadd.f32 0.0, %v1638
        %1640 = vdwg.mxu0
        %1641 = vmatpush.msra.mxu0 0.0
        %1642 = vmatpush.msra.mxu0 0.0
        %1643 = vmatpush.msra.mxu0 0.0
        %1644 = vmatpush.msra.mxu0 0.0
        %1645 = vmatpush.msra.mxu0 0.0
        %1646 = vmatpush.msra.mxu0 0.0
        %1647 = vmatpush.msra.mxu0 0.0
        %1648 = vmatpush.msra.mxu0 0.0
        %1649 = vmatpush.msra.mxu0 0.0
        %1650 = vmatpush.msra.mxu0 0.0
        %1651 = vmatpush.msra.mxu0 0.0
        %1652 = vmatpush.msra.mxu0 0.0
        %1653 = vmatpush.msra.mxu0 0.0
        %1654 = vmatpush.msra.mxu0 0.0
        %1655 = vmatpush.msra.mxu0 0.0
        %1656 = vmatpush.msra.mxu0 %v247
        %1657 = vmatmul.f32.gmra.mxu0 %v268
        %v1658 = vpop.f32.mrf.mxu0
        %v1659 = vadd.f32 0.0, %v1658
        %1660 = vmatmul.f32.gmra.mxu0 %v271
        %v1661 = vpop.f32.mrf.mxu0
        %v1662 = vadd.f32 0.0, %v1661
        %1663 = vmatmul.f32.gmra.mxu0 %v274
        %v1664 = vpop.f32.mrf.mxu0
        %v1665 = vadd.f32 0.0, %v1664
        %1666 = vmatmul.f32.gmra.mxu0 %v277
        %v1667 = vpop.f32.mrf.mxu0
        %v1668 = vadd.f32 0.0, %v1667
        %1669 = vmatmul.f32.gmra.mxu0 %v280
        %v1670 = vpop.f32.mrf.mxu0
        %v1671 = vadd.f32 0.0, %v1670
        %1672 = vmatmul.f32.gmra.mxu0 %v283
        %v1673 = vpop.f32.mrf.mxu0
        %v1674 = vadd.f32 0.0, %v1673
        %1675 = vmatmul.f32.gmra.mxu0 %v286
        %v1676 = vpop.f32.mrf.mxu0
        %v1677 = vadd.f32 0.0, %v1676
        %1678 = vmatmul.f32.gmra.mxu0 %v289
        %v1679 = vpop.f32.mrf.mxu0
        %v1680 = vadd.f32 0.0, %v1679
        %1681 = vmatmul.f32.gmra.mxu0 %v292
        %v1682 = vpop.f32.mrf.mxu0
        %v1683 = vadd.f32 0.0, %v1682
        %1684 = vmatmul.f32.gmra.mxu0 %v295
        %v1685 = vpop.f32.mrf.mxu0
        %v1686 = vadd.f32 0.0, %v1685
        %1687 = vmatmul.f32.gmra.mxu0 %v298
        %v1688 = vpop.f32.mrf.mxu0
        %v1689 = vadd.f32 0.0, %v1688
        %1690 = vmatmul.f32.gmra.mxu0 %v301
        %v1691 = vpop.f32.mrf.mxu0
        %v1692 = vadd.f32 0.0, %v1691
        %1693 = vmatmul.f32.gmra.mxu0 %v304
        %v1694 = vpop.f32.mrf.mxu0
        %v1695 = vadd.f32 0.0, %v1694
        %1696 = vmatmul.f32.gmra.mxu0 %v307
        %v1697 = vpop.f32.mrf.mxu0
        %v1698 = vadd.f32 0.0, %v1697
        %1699 = vmatmul.f32.gmra.mxu0 %v310
        %v1700 = vpop.f32.mrf.mxu0
        %v1701 = vadd.f32 0.0, %v1700
        %1702 = vmatmul.f32.gmra.mxu0 %v313
        %v1703 = vpop.f32.mrf.mxu0
        %v1704 = vadd.f32 0.0, %v1703
        %1705 = vdwg.mxu0
        %v1706 = vmin.f32 %v1510, %v1594
        %v1707 = vmin.f32 %v1511, %v1597
        %v1708 = vmin.f32 %v1512, %v1600
        %v1709 = vmin.f32 %v1513, %v1603
        %v1710 = vmin.f32 %v1514, %v1606
        %v1711 = vmin.f32 %v1515, %v1609
        %v1712 = vmin.f32 %v1516, %v1612
        %v1713 = vmin.f32 %v1517, %v1615
        %v1714 = vmin.f32 %v1518, %v1618
        %v1715 = vmin.f32 %v1519, %v1621
        %v1716 = vmin.f32 %v1520, %v1624
        %v1717 = vmin.f32 %v1521, %v1627
        %v1718 = vmin.f32 %v1522, %v1630
        %v1719 = vmin.f32 %v1523, %v1633
        %v1720 = vmin.f32 %v1524, %v1636
        %v1721 = vmin.f32 %v1525, %v1639
        %v1722 = vmin.f32 %v1706, %v1659
        %v1723 = vmin.f32 %v1707, %v1662
        %v1724 = vmin.f32 %v1708, %v1665
        %v1725 = vmin.f32 %v1709, %v1668
        %v1726 = vmin.f32 %v1710, %v1671
        %v1727 = vmin.f32 %v1711, %v1674
        %v1728 = vmin.f32 %v1712, %v1677
        %v1729 = vmin.f32 %v1713, %v1680
        %v1730 = vmin.f32 %v1714, %v1683
        %v1731 = vmin.f32 %v1715, %v1686
        %v1732 = vmin.f32 %v1716, %v1689
        %v1733 = vmin.f32 %v1717, %v1692
        %v1734 = vmin.f32 %v1718, %v1695
        %v1735 = vmin.f32 %v1719, %v1698
        %v1736 = vmin.f32 %v1720, %v1701
        %v1737 = vmin.f32 %v1721, %v1704
        %v1738 = vmin.f32 %v1594, %v1600
        %v1739 = vmin.f32 %v1597, %v1603
        %v1740 = vmin.f32 %v1738, %v1606
        %v1741 = vmin.f32 %v1739, %v1609
        %v1742 = vmin.f32 %v1740, %v1612
        %v1743 = vmin.f32 %v1741, %v1615
        %v1744 = vmin.f32 %v1742, %v1618
        %v1745 = vmin.f32 %v1743, %v1621
        %v1746 = vmin.f32 %v1744, %v1624
        %v1747 = vmin.f32 %v1745, %v1627
        %v1748 = vmin.f32 %v1746, %v1630
        %v1749 = vmin.f32 %v1747, %v1633
        %v1750 = vmin.f32 %v1748, %v1636
        %v1751 = vmin.f32 %v1749, %v1639
        %v1752 = vmin.f32 %v1750, %v1751
        %v1753 = vrot.slane %v1752, 4
        %v1754 = vmin.f32 %v1752, %v1753
        %v1755 = vrot.slane %v1754, 2
        %v1756 = vmin.f32 %v1754, %v1755
        %v1757 = vrot.slane %v1756, 1
        %v1758 = vmin.f32 %v1756, %v1757
        %v1759 = vmin.f32 %v1659, %v1665
        %v1760 = vmin.f32 %v1662, %v1668
        %v1761 = vmin.f32 %v1759, %v1671
        %v1762 = vmin.f32 %v1760, %v1674
        %v1763 = vmin.f32 %v1761, %v1677
        %v1764 = vmin.f32 %v1762, %v1680
        %v1765 = vmin.f32 %v1763, %v1683
        %v1766 = vmin.f32 %v1764, %v1686
        %v1767 = vmin.f32 %v1765, %v1689
        %v1768 = vmin.f32 %v1766, %v1692
        %v1769 = vmin.f32 %v1767, %v1695
        %v1770 = vmin.f32 %v1768, %v1698
        %v1771 = vmin.f32 %v1769, %v1701
        %v1772 = vmin.f32 %v1770, %v1704
        %v1773 = vmin.f32 %v1771, %v1772
        %v1774 = vrot.slane %v1773, 4
        %v1775 = vmin.f32 %v1773, %v1774
        %v1776 = vrot.slane %v1775, 2
        %v1777 = vmin.f32 %v1775, %v1776
        %v1778 = vrot.slane %v1777, 1
        %v1779 = vmin.f32 %v1777, %v1778
        %v1780 = vld [vmem:[#allocation2 + $0xc] sm:$0x3]
        %v1783 = vrot.slane %v1779, 7
        %v1784 = vsel %vm507, %v1758, %v1783
        %v1786 = vmin.f32 %v1780, %v1784
        %1787 = vst.msk [vmem:[#allocation2 + $0xc] sm:$0x3] %vm514, %v1786
        %1788 = vmatpush.msra.mxu0 0.0
        %1789 = vmatpush.msra.mxu0 0.0
        %1790 = vmatpush.msra.mxu0 0.0
        %1791 = vmatpush.msra.mxu0 0.0
        %1792 = vmatpush.msra.mxu0 0.0
        %1793 = vmatpush.msra.mxu0 0.0
        %1794 = vmatpush.msra.mxu0 0.0
        %1795 = vmatpush.msra.mxu0 0.0
        %1796 = vmatpush.msra.mxu0 0.0
        %1797 = vmatpush.msra.mxu0 0.0
        %1798 = vmatpush.msra.mxu0 0.0
        %1799 = vmatpush.msra.mxu0 0.0
        %1800 = vmatpush.msra.mxu0 0.0
        %1801 = vmatpush.msra.mxu0 0.0
        %1802 = vmatpush.msra.mxu0 0.0
        %1803 = vmatpush.msra.mxu0 %v248
        %1804 = vmatmul.f32.gmra.mxu0 %v268
        %v1805 = vpop.f32.mrf.mxu0
        %v1806 = vadd.f32 0.0, %v1805
        %1807 = vmatmul.f32.gmra.mxu0 %v271
        %v1808 = vpop.f32.mrf.mxu0
        %v1809 = vadd.f32 0.0, %v1808
        %1810 = vmatmul.f32.gmra.mxu0 %v274
        %v1811 = vpop.f32.mrf.mxu0
        %v1812 = vadd.f32 0.0, %v1811
        %1813 = vmatmul.f32.gmra.mxu0 %v277
        %v1814 = vpop.f32.mrf.mxu0
        %v1815 = vadd.f32 0.0, %v1814
        %1816 = vmatmul.f32.gmra.mxu0 %v280
        %v1817 = vpop.f32.mrf.mxu0
        %v1818 = vadd.f32 0.0, %v1817
        %1819 = vmatmul.f32.gmra.mxu0 %v283
        %v1820 = vpop.f32.mrf.mxu0
        %v1821 = vadd.f32 0.0, %v1820
        %1822 = vmatmul.f32.gmra.mxu0 %v286
        %v1823 = vpop.f32.mrf.mxu0
        %v1824 = vadd.f32 0.0, %v1823
        %1825 = vmatmul.f32.gmra.mxu0 %v289
        %v1826 = vpop.f32.mrf.mxu0
        %v1827 = vadd.f32 0.0, %v1826
        %1828 = vmatmul.f32.gmra.mxu0 %v292
        %v1829 = vpop.f32.mrf.mxu0
        %v1830 = vadd.f32 0.0, %v1829
        %1831 = vmatmul.f32.gmra.mxu0 %v295
        %v1832 = vpop.f32.mrf.mxu0
        %v1833 = vadd.f32 0.0, %v1832
        %1834 = vmatmul.f32.gmra.mxu0 %v298
        %v1835 = vpop.f32.mrf.mxu0
        %v1836 = vadd.f32 0.0, %v1835
        %1837 = vmatmul.f32.gmra.mxu0 %v301
        %v1838 = vpop.f32.mrf.mxu0
        %v1839 = vadd.f32 0.0, %v1838
        %1840 = vmatmul.f32.gmra.mxu0 %v304
        %v1841 = vpop.f32.mrf.mxu0
        %v1842 = vadd.f32 0.0, %v1841
        %1843 = vmatmul.f32.gmra.mxu0 %v307
        %v1844 = vpop.f32.mrf.mxu0
        %v1845 = vadd.f32 0.0, %v1844
        %1846 = vmatmul.f32.gmra.mxu0 %v310
        %v1847 = vpop.f32.mrf.mxu0
        %v1848 = vadd.f32 0.0, %v1847
        %1849 = vmatmul.f32.gmra.mxu0 %v313
        %v1850 = vpop.f32.mrf.mxu0
        %v1851 = vadd.f32 0.0, %v1850
        %1852 = vdwg.mxu0
        %1853 = vmatpush.msra.mxu0 0.0
        %1854 = vmatpush.msra.mxu0 0.0
        %1855 = vmatpush.msra.mxu0 0.0
        %1856 = vmatpush.msra.mxu0 0.0
        %1857 = vmatpush.msra.mxu0 0.0
        %1858 = vmatpush.msra.mxu0 0.0
        %1859 = vmatpush.msra.mxu0 0.0
        %1860 = vmatpush.msra.mxu0 0.0
        %1861 = vmatpush.msra.mxu0 0.0
        %1862 = vmatpush.msra.mxu0 0.0
        %1863 = vmatpush.msra.mxu0 0.0
        %1864 = vmatpush.msra.mxu0 0.0
        %1865 = vmatpush.msra.mxu0 0.0
        %1866 = vmatpush.msra.mxu0 0.0
        %1867 = vmatpush.msra.mxu0 0.0
        %1868 = vmatpush.msra.mxu0 %v249
        %1869 = vmatmul.f32.gmra.mxu0 %v268
        %v1870 = vpop.f32.mrf.mxu0
        %v1871 = vadd.f32 0.0, %v1870
        %1872 = vmatmul.f32.gmra.mxu0 %v271
        %v1873 = vpop.f32.mrf.mxu0
        %v1874 = vadd.f32 0.0, %v1873
        %1875 = vmatmul.f32.gmra.mxu0 %v274
        %v1876 = vpop.f32.mrf.mxu0
        %v1877 = vadd.f32 0.0, %v1876
        %1878 = vmatmul.f32.gmra.mxu0 %v277
        %v1879 = vpop.f32.mrf.mxu0
        %v1880 = vadd.f32 0.0, %v1879
        %1881 = vmatmul.f32.gmra.mxu0 %v280
        %v1882 = vpop.f32.mrf.mxu0
        %v1883 = vadd.f32 0.0, %v1882
        %1884 = vmatmul.f32.gmra.mxu0 %v283
        %v1885 = vpop.f32.mrf.mxu0
        %v1886 = vadd.f32 0.0, %v1885
        %1887 = vmatmul.f32.gmra.mxu0 %v286
        %v1888 = vpop.f32.mrf.mxu0
        %v1889 = vadd.f32 0.0, %v1888
        %1890 = vmatmul.f32.gmra.mxu0 %v289
        %v1891 = vpop.f32.mrf.mxu0
        %v1892 = vadd.f32 0.0, %v1891
        %1893 = vmatmul.f32.gmra.mxu0 %v292
        %v1894 = vpop.f32.mrf.mxu0
        %v1895 = vadd.f32 0.0, %v1894
        %1896 = vmatmul.f32.gmra.mxu0 %v295
        %v1897 = vpop.f32.mrf.mxu0
        %v1898 = vadd.f32 0.0, %v1897
        %1899 = vmatmul.f32.gmra.mxu0 %v298
        %v1900 = vpop.f32.mrf.mxu0
        %v1901 = vadd.f32 0.0, %v1900
        %1902 = vmatmul.f32.gmra.mxu0 %v301
        %v1903 = vpop.f32.mrf.mxu0
        %v1904 = vadd.f32 0.0, %v1903
        %1905 = vmatmul.f32.gmra.mxu0 %v304
        %v1906 = vpop.f32.mrf.mxu0
        %v1907 = vadd.f32 0.0, %v1906
        %1908 = vmatmul.f32.gmra.mxu0 %v307
        %v1909 = vpop.f32.mrf.mxu0
        %v1910 = vadd.f32 0.0, %v1909
        %1911 = vmatmul.f32.gmra.mxu0 %v310
        %v1912 = vpop.f32.mrf.mxu0
        %v1913 = vadd.f32 0.0, %v1912
        %1914 = vmatmul.f32.gmra.mxu0 %v313
        %v1915 = vpop.f32.mrf.mxu0
        %v1916 = vadd.f32 0.0, %v1915
        %1917 = vdwg.mxu0
        %v1918 = vmin.f32 %v1722, %v1806
        %v1919 = vmin.f32 %v1723, %v1809
        %v1920 = vmin.f32 %v1724, %v1812
        %v1921 = vmin.f32 %v1725, %v1815
        %v1922 = vmin.f32 %v1726, %v1818
        %v1923 = vmin.f32 %v1727, %v1821
        %v1924 = vmin.f32 %v1728, %v1824
        %v1925 = vmin.f32 %v1729, %v1827
        %v1926 = vmin.f32 %v1730, %v1830
        %v1927 = vmin.f32 %v1731, %v1833
        %v1928 = vmin.f32 %v1732, %v1836
        %v1929 = vmin.f32 %v1733, %v1839
        %v1930 = vmin.f32 %v1734, %v1842
        %v1931 = vmin.f32 %v1735, %v1845
        %v1932 = vmin.f32 %v1736, %v1848
        %v1933 = vmin.f32 %v1737, %v1851
        %v1934 = vmin.f32 %v1918, %v1871
        %v1935 = vmin.f32 %v1919, %v1874
        %v1936 = vmin.f32 %v1920, %v1877
        %v1937 = vmin.f32 %v1921, %v1880
        %v1938 = vmin.f32 %v1922, %v1883
        %v1939 = vmin.f32 %v1923, %v1886
        %v1940 = vmin.f32 %v1924, %v1889
        %v1941 = vmin.f32 %v1925, %v1892
        %v1942 = vmin.f32 %v1926, %v1895
        %v1943 = vmin.f32 %v1927, %v1898
        %v1944 = vmin.f32 %v1928, %v1901
        %v1945 = vmin.f32 %v1929, %v1904
        %v1946 = vmin.f32 %v1930, %v1907
        %v1947 = vmin.f32 %v1931, %v1910
        %v1948 = vmin.f32 %v1932, %v1913
        %v1949 = vmin.f32 %v1933, %v1916
        %v1950 = vmin.f32 %v1806, %v1812
        %v1951 = vmin.f32 %v1809, %v1815
        %v1952 = vmin.f32 %v1950, %v1818
        %v1953 = vmin.f32 %v1951, %v1821
        %v1954 = vmin.f32 %v1952, %v1824
        %v1955 = vmin.f32 %v1953, %v1827
        %v1956 = vmin.f32 %v1954, %v1830
        %v1957 = vmin.f32 %v1955, %v1833
        %v1958 = vmin.f32 %v1956, %v1836
        %v1959 = vmin.f32 %v1957, %v1839
        %v1960 = vmin.f32 %v1958, %v1842
        %v1961 = vmin.f32 %v1959, %v1845
        %v1962 = vmin.f32 %v1960, %v1848
        %v1963 = vmin.f32 %v1961, %v1851
        %v1964 = vmin.f32 %v1962, %v1963
        %v1965 = vrot.slane %v1964, 4
        %v1966 = vmin.f32 %v1964, %v1965
        %v1967 = vrot.slane %v1966, 2
        %v1968 = vmin.f32 %v1966, %v1967
        %v1969 = vrot.slane %v1968, 1
        %v1970 = vmin.f32 %v1968, %v1969
        %v1971 = vmin.f32 %v1871, %v1877
        %v1972 = vmin.f32 %v1874, %v1880
        %v1973 = vmin.f32 %v1971, %v1883
        %v1974 = vmin.f32 %v1972, %v1886
        %v1975 = vmin.f32 %v1973, %v1889
        %v1976 = vmin.f32 %v1974, %v1892
        %v1977 = vmin.f32 %v1975, %v1895
        %v1978 = vmin.f32 %v1976, %v1898
        %v1979 = vmin.f32 %v1977, %v1901
        %v1980 = vmin.f32 %v1978, %v1904
        %v1981 = vmin.f32 %v1979, %v1907
        %v1982 = vmin.f32 %v1980, %v1910
        %v1983 = vmin.f32 %v1981, %v1913
        %v1984 = vmin.f32 %v1982, %v1916
        %v1985 = vmin.f32 %v1983, %v1984
        %v1986 = vrot.slane %v1985, 4
        %v1987 = vmin.f32 %v1985, %v1986
        %v1988 = vrot.slane %v1987, 2
        %v1989 = vmin.f32 %v1987, %v1988
        %v1990 = vrot.slane %v1989, 1
        %v1991 = vmin.f32 %v1989, %v1990
        %v1992 = vld [vmem:[#allocation2 + $0xe] sm:$0x3]
        %v1995 = vrot.slane %v1991, 7
        %v1996 = vsel %vm507, %v1970, %v1995
        %v1998 = vmin.f32 %v1992, %v1996
        %1999 = vst.msk [vmem:[#allocation2 + $0xe] sm:$0x3] %vm514, %v1998
        %2000 = vmin.xlane.f32.xlu0 %v1934
        %v2001 = vpop.xlane.xlu0 %2000
        %2002 = vmin.xlane.f32.xlu0 %v1935
        %v2003 = vpop.xlane.xlu0 %2002
        %2004 = vmin.xlane.f32.xlu0 %v1936
        %v2005 = vpop.xlane.xlu0 %2004
        %2006 = vmin.xlane.f32.xlu0 %v1937
        %v2007 = vpop.xlane.xlu0 %2006
        %2008 = vmin.xlane.f32.xlu0 %v1938
        %v2009 = vpop.xlane.xlu0 %2008
        %2010 = vmin.xlane.f32.xlu0 %v1939
        %v2011 = vpop.xlane.xlu0 %2010
        %2012 = vmin.xlane.f32.xlu0 %v1940
        %v2013 = vpop.xlane.xlu0 %2012
        %2014 = vmin.xlane.f32.xlu0 %v1941
        %v2015 = vpop.xlane.xlu0 %2014
        %2016 = vmin.xlane.f32.xlu0 %v1942
        %v2017 = vpop.xlane.xlu0 %2016
        %2018 = vmin.xlane.f32.xlu0 %v1943
        %v2019 = vpop.xlane.xlu0 %2018
        %2020 = vmin.xlane.f32.xlu0 %v1944
        %v2021 = vpop.xlane.xlu0 %2020
        %2022 = vmin.xlane.f32.xlu0 %v1945
        %v2023 = vpop.xlane.xlu0 %2022
        %2024 = vmin.xlane.f32.xlu0 %v1946
        %v2025 = vpop.xlane.xlu0 %2024
        %2026 = vmin.xlane.f32.xlu0 %v1947
        %v2027 = vpop.xlane.xlu0 %2026
        %2028 = vmin.xlane.f32.xlu0 %v1948
        %v2029 = vpop.xlane.xlu0 %2028
        %2030 = vmin.xlane.f32.xlu0 %v1949
        %v2031 = vpop.xlane.xlu0 %2030
        %v2032 = vmax.f32 %v2001, 0.0
        %v2033 = vmax.f32 %v2003, 0.0
        %v2034 = vmax.f32 %v2005, 0.0
        %v2035 = vmax.f32 %v2007, 0.0
        %v2036 = vmax.f32 %v2009, 0.0
        %v2037 = vmax.f32 %v2011, 0.0
        %v2038 = vmax.f32 %v2013, 0.0
        %v2039 = vmax.f32 %v2015, 0.0
        %v2040 = vmax.f32 %v2017, 0.0
        %v2041 = vmax.f32 %v2019, 0.0
        %v2042 = vmax.f32 %v2021, 0.0
        %v2043 = vmax.f32 %v2023, 0.0
        %v2044 = vmax.f32 %v2025, 0.0
        %v2045 = vmax.f32 %v2027, 0.0
        %v2046 = vmax.f32 %v2029, 0.0
        %v2047 = vmax.f32 %v2031, 0.0
        %v2048 = vrsqrt.pop %v2032
        %v2049 = vmul.f32 %v2048, %v2032
        %v2050 = vmul.f32 %v2049, %v2048
        %v2051 = vmul.f32 0.5, %v2050
        %v2052 = vsub.f32 1.5, %v2051
        %v2053 = vmul.f32 %v2048, %v2052
        %v2054 = vmul.f32 %v2032, %v2053
        %vm2055 = vcmp.eq.f32.partialorder %v2032, inf
        %v2056 = vsel %vm2055, %v2032, %v2054
        %vm2057 = vcmp.eq.f32.partialorder %v2032, 0.0
        %v2058 = vand.u32 %v2032, 2147483648
        %v2059 = vsel %vm2057, %v2058, %v2056
        %v2060 = vrsqrt.pop %v2033
        %v2061 = vmul.f32 %v2060, %v2033
        %v2062 = vmul.f32 %v2061, %v2060
        %v2063 = vmul.f32 0.5, %v2062
        %v2064 = vsub.f32 1.5, %v2063
        %v2065 = vmul.f32 %v2060, %v2064
        %v2066 = vmul.f32 %v2033, %v2065
        %vm2067 = vcmp.eq.f32.partialorder %v2033, inf
        %v2068 = vsel %vm2067, %v2033, %v2066
        %vm2069 = vcmp.eq.f32.partialorder %v2033, 0.0
        %v2070 = vand.u32 %v2033, 2147483648
        %v2071 = vsel %vm2069, %v2070, %v2068
        %v2072 = vrsqrt.pop %v2034
        %v2073 = vmul.f32 %v2072, %v2034
        %v2074 = vmul.f32 %v2073, %v2072
        %v2075 = vmul.f32 0.5, %v2074
        %v2076 = vsub.f32 1.5, %v2075
        %v2077 = vmul.f32 %v2072, %v2076
        %v2078 = vmul.f32 %v2034, %v2077
        %vm2079 = vcmp.eq.f32.partialorder %v2034, inf
        %v2080 = vsel %vm2079, %v2034, %v2078
        %vm2081 = vcmp.eq.f32.partialorder %v2034, 0.0
        %v2082 = vand.u32 %v2034, 2147483648
        %v2083 = vsel %vm2081, %v2082, %v2080
        %v2084 = vrsqrt.pop %v2035
        %v2085 = vmul.f32 %v2084, %v2035
        %v2086 = vmul.f32 %v2085, %v2084
        %v2087 = vmul.f32 0.5, %v2086
        %v2088 = vsub.f32 1.5, %v2087
        %v2089 = vmul.f32 %v2084, %v2088
        %v2090 = vmul.f32 %v2035, %v2089
        %vm2091 = vcmp.eq.f32.partialorder %v2035, inf
        %v2092 = vsel %vm2091, %v2035, %v2090
        %vm2093 = vcmp.eq.f32.partialorder %v2035, 0.0
        %v2094 = vand.u32 %v2035, 2147483648
        %v2095 = vsel %vm2093, %v2094, %v2092
        %v2096 = vrsqrt.pop %v2036
        %v2097 = vmul.f32 %v2096, %v2036
        %v2098 = vmul.f32 %v2097, %v2096
        %v2099 = vmul.f32 0.5, %v2098
        %v2100 = vsub.f32 1.5, %v2099
        %v2101 = vmul.f32 %v2096, %v2100
        %v2102 = vmul.f32 %v2036, %v2101
        %vm2103 = vcmp.eq.f32.partialorder %v2036, inf
        %v2104 = vsel %vm2103, %v2036, %v2102
        %vm2105 = vcmp.eq.f32.partialorder %v2036, 0.0
        %v2106 = vand.u32 %v2036, 2147483648
        %v2107 = vsel %vm2105, %v2106, %v2104
        %v2108 = vrsqrt.pop %v2037
        %v2109 = vmul.f32 %v2108, %v2037
        %v2110 = vmul.f32 %v2109, %v2108
        %v2111 = vmul.f32 0.5, %v2110
        %v2112 = vsub.f32 1.5, %v2111
        %v2113 = vmul.f32 %v2108, %v2112
        %v2114 = vmul.f32 %v2037, %v2113
        %vm2115 = vcmp.eq.f32.partialorder %v2037, inf
        %v2116 = vsel %vm2115, %v2037, %v2114
        %vm2117 = vcmp.eq.f32.partialorder %v2037, 0.0
        %v2118 = vand.u32 %v2037, 2147483648
        %v2119 = vsel %vm2117, %v2118, %v2116
        %v2120 = vrsqrt.pop %v2038
        %v2121 = vmul.f32 %v2120, %v2038
        %v2122 = vmul.f32 %v2121, %v2120
        %v2123 = vmul.f32 0.5, %v2122
        %v2124 = vsub.f32 1.5, %v2123
        %v2125 = vmul.f32 %v2120, %v2124
        %v2126 = vmul.f32 %v2038, %v2125
        %vm2127 = vcmp.eq.f32.partialorder %v2038, inf
        %v2128 = vsel %vm2127, %v2038, %v2126
        %vm2129 = vcmp.eq.f32.partialorder %v2038, 0.0
        %v2130 = vand.u32 %v2038, 2147483648
        %v2131 = vsel %vm2129, %v2130, %v2128
        %v2132 = vrsqrt.pop %v2039
        %v2133 = vmul.f32 %v2132, %v2039
        %v2134 = vmul.f32 %v2133, %v2132
        %v2135 = vmul.f32 0.5, %v2134
        %v2136 = vsub.f32 1.5, %v2135
        %v2137 = vmul.f32 %v2132, %v2136
        %v2138 = vmul.f32 %v2039, %v2137
        %vm2139 = vcmp.eq.f32.partialorder %v2039, inf
        %v2140 = vsel %vm2139, %v2039, %v2138
        %vm2141 = vcmp.eq.f32.partialorder %v2039, 0.0
        %v2142 = vand.u32 %v2039, 2147483648
        %v2143 = vsel %vm2141, %v2142, %v2140
        %v2144 = vrsqrt.pop %v2040
        %v2145 = vmul.f32 %v2144, %v2040
        %v2146 = vmul.f32 %v2145, %v2144
        %v2147 = vmul.f32 0.5, %v2146
        %v2148 = vsub.f32 1.5, %v2147
        %v2149 = vmul.f32 %v2144, %v2148
        %v2150 = vmul.f32 %v2040, %v2149
        %vm2151 = vcmp.eq.f32.partialorder %v2040, inf
        %v2152 = vsel %vm2151, %v2040, %v2150
        %vm2153 = vcmp.eq.f32.partialorder %v2040, 0.0
        %v2154 = vand.u32 %v2040, 2147483648
        %v2155 = vsel %vm2153, %v2154, %v2152
        %v2156 = vrsqrt.pop %v2041
        %v2157 = vmul.f32 %v2156, %v2041
        %v2158 = vmul.f32 %v2157, %v2156
        %v2159 = vmul.f32 0.5, %v2158
        %v2160 = vsub.f32 1.5, %v2159
        %v2161 = vmul.f32 %v2156, %v2160
        %v2162 = vmul.f32 %v2041, %v2161
        %vm2163 = vcmp.eq.f32.partialorder %v2041, inf
        %v2164 = vsel %vm2163, %v2041, %v2162
        %vm2165 = vcmp.eq.f32.partialorder %v2041, 0.0
        %v2166 = vand.u32 %v2041, 2147483648
        %v2167 = vsel %vm2165, %v2166, %v2164
        %v2168 = vrsqrt.pop %v2042
        %v2169 = vmul.f32 %v2168, %v2042
        %v2170 = vmul.f32 %v2169, %v2168
        %v2171 = vmul.f32 0.5, %v2170
        %v2172 = vsub.f32 1.5, %v2171
        %v2173 = vmul.f32 %v2168, %v2172
        %v2174 = vmul.f32 %v2042, %v2173
        %vm2175 = vcmp.eq.f32.partialorder %v2042, inf
        %v2176 = vsel %vm2175, %v2042, %v2174
        %vm2177 = vcmp.eq.f32.partialorder %v2042, 0.0
        %v2178 = vand.u32 %v2042, 2147483648
        %v2179 = vsel %vm2177, %v2178, %v2176
        %v2180 = vrsqrt.pop %v2043
        %v2181 = vmul.f32 %v2180, %v2043
        %v2182 = vmul.f32 %v2181, %v2180
        %v2183 = vmul.f32 0.5, %v2182
        %v2184 = vsub.f32 1.5, %v2183
        %v2185 = vmul.f32 %v2180, %v2184
        %v2186 = vmul.f32 %v2043, %v2185
        %vm2187 = vcmp.eq.f32.partialorder %v2043, inf
        %v2188 = vsel %vm2187, %v2043, %v2186
        %vm2189 = vcmp.eq.f32.partialorder %v2043, 0.0
        %v2190 = vand.u32 %v2043, 2147483648
        %v2191 = vsel %vm2189, %v2190, %v2188
        %v2192 = vrsqrt.pop %v2044
        %v2193 = vmul.f32 %v2192, %v2044
        %v2194 = vmul.f32 %v2193, %v2192
        %v2195 = vmul.f32 0.5, %v2194
        %v2196 = vsub.f32 1.5, %v2195
        %v2197 = vmul.f32 %v2192, %v2196
        %v2198 = vmul.f32 %v2044, %v2197
        %vm2199 = vcmp.eq.f32.partialorder %v2044, inf
        %v2200 = vsel %vm2199, %v2044, %v2198
        %vm2201 = vcmp.eq.f32.partialorder %v2044, 0.0
        %v2202 = vand.u32 %v2044, 2147483648
        %v2203 = vsel %vm2201, %v2202, %v2200
        %v2204 = vrsqrt.pop %v2045
        %v2205 = vmul.f32 %v2204, %v2045
        %v2206 = vmul.f32 %v2205, %v2204
        %v2207 = vmul.f32 0.5, %v2206
        %v2208 = vsub.f32 1.5, %v2207
        %v2209 = vmul.f32 %v2204, %v2208
        %v2210 = vmul.f32 %v2045, %v2209
        %vm2211 = vcmp.eq.f32.partialorder %v2045, inf
        %v2212 = vsel %vm2211, %v2045, %v2210
        %vm2213 = vcmp.eq.f32.partialorder %v2045, 0.0
        %v2214 = vand.u32 %v2045, 2147483648
        %v2215 = vsel %vm2213, %v2214, %v2212
        %v2216 = vrsqrt.pop %v2046
        %v2217 = vmul.f32 %v2216, %v2046
        %v2218 = vmul.f32 %v2217, %v2216
        %v2219 = vmul.f32 0.5, %v2218
        %v2220 = vsub.f32 1.5, %v2219
        %v2221 = vmul.f32 %v2216, %v2220
        %v2222 = vmul.f32 %v2046, %v2221
        %vm2223 = vcmp.eq.f32.partialorder %v2046, inf
        %v2224 = vsel %vm2223, %v2046, %v2222
        %vm2225 = vcmp.eq.f32.partialorder %v2046, 0.0
        %v2226 = vand.u32 %v2046, 2147483648
        %v2227 = vsel %vm2225, %v2226, %v2224
        %v2228 = vrsqrt.pop %v2047
        %v2229 = vmul.f32 %v2228, %v2047
        %v2230 = vmul.f32 %v2229, %v2228
        %v2231 = vmul.f32 0.5, %v2230
        %v2232 = vsub.f32 1.5, %v2231
        %v2233 = vmul.f32 %v2228, %v2232
        %v2234 = vmul.f32 %v2047, %v2233
        %vm2235 = vcmp.eq.f32.partialorder %v2047, inf
        %v2236 = vsel %vm2235, %v2047, %v2234
        %vm2237 = vcmp.eq.f32.partialorder %v2047, 0.0
        %v2238 = vand.u32 %v2047, 2147483648
        %v2239 = vsel %vm2237, %v2238, %v2236
        %s2240 = smul.u32 %s26, 128
        %v2241 = vlaneseq
        %v2242 = vshrl.u32 %v2241, 7
        %v2243 = vadd.s32 %v2242, 8
        %v2244 = vadd.s32 %v2242, 16
        %v2245 = vadd.s32 %v2242, 24
        %v2246 = vadd.s32 %v2242, 32
        %v2247 = vadd.s32 %v2242, 40
        %v2248 = vadd.s32 %v2242, 48
        %v2249 = vadd.s32 %v2242, 56
        %v2250 = vadd.s32 %v2242, 64
        %v2251 = vadd.s32 %v2242, 72
        %v2252 = vadd.s32 %v2242, 80
        %v2253 = vadd.s32 %v2242, 88
        %v2254 = vadd.s32 %v2242, 96
        %v2255 = vadd.s32 %v2242, 104
        %v2256 = vadd.s32 %v2242, 112
        %v2257 = vadd.s32 %v2242, 120
        %v2258 = vstv %s2240
        %v2259 = vadd.s32 %v2258, %v2242
        %v2260 = vadd.s32 %v2258, %v2243
        %v2261 = vadd.s32 %v2258, %v2244
        %v2262 = vadd.s32 %v2258, %v2245
        %v2263 = vadd.s32 %v2258, %v2246
        %v2264 = vadd.s32 %v2258, %v2247
        %v2265 = vadd.s32 %v2258, %v2248
        %v2266 = vadd.s32 %v2258, %v2249
        %v2267 = vadd.s32 %v2258, %v2250
        %v2268 = vadd.s32 %v2258, %v2251
        %v2269 = vadd.s32 %v2258, %v2252
        %v2270 = vadd.s32 %v2258, %v2253
        %v2271 = vadd.s32 %v2258, %v2254
        %v2272 = vadd.s32 %v2258, %v2255
        %v2273 = vadd.s32 %v2258, %v2256
        %v2274 = vadd.s32 %v2258, %v2257
        %vm2275 = vcmp.lt.s32.totalorder %v2259, 64
        %vm2276 = vcmp.lt.s32.totalorder %v2260, 64
        %vm2277 = vcmp.lt.s32.totalorder %v2261, 64
        %vm2278 = vcmp.lt.s32.totalorder %v2262, 64
        %vm2279 = vcmp.lt.s32.totalorder %v2263, 64
        %vm2280 = vcmp.lt.s32.totalorder %v2264, 64
        %vm2281 = vcmp.lt.s32.totalorder %v2265, 64
        %vm2282 = vcmp.lt.s32.totalorder %v2266, 64
        %vm2283 = vcmp.lt.s32.totalorder %v2267, 64
        %vm2284 = vcmp.lt.s32.totalorder %v2268, 64
        %vm2285 = vcmp.lt.s32.totalorder %v2269, 64
        %vm2286 = vcmp.lt.s32.totalorder %v2270, 64
        %vm2287 = vcmp.lt.s32.totalorder %v2271, 64
        %vm2288 = vcmp.lt.s32.totalorder %v2272, 64
        %vm2289 = vcmp.lt.s32.totalorder %v2273, 64
        %vm2290 = vcmp.lt.s32.totalorder %v2274, 64
        %v2291 = vsel %vm2275, %v2059, 0.0
        %v2292 = vsel %vm2276, %v2071, 0.0
        %v2293 = vsel %vm2277, %v2083, 0.0
        %v2294 = vsel %vm2278, %v2095, 0.0
        %v2295 = vsel %vm2279, %v2107, 0.0
        %v2296 = vsel %vm2280, %v2119, 0.0
        %v2297 = vsel %vm2281, %v2131, 0.0
        %v2298 = vsel %vm2282, %v2143, 0.0
        %v2299 = vsel %vm2283, %v2155, 0.0
        %v2300 = vsel %vm2284, %v2167, 0.0
        %v2301 = vsel %vm2285, %v2179, 0.0
        %v2302 = vsel %vm2286, %v2191, 0.0
        %v2303 = vsel %vm2287, %v2203, 0.0
        %v2304 = vsel %vm2288, %v2215, 0.0
        %v2305 = vsel %vm2289, %v2227, 0.0
        %v2306 = vsel %vm2290, %v2239, 0.0
        %v2307 = vadd.f32 %v2291, %v2292
        %v2308 = vadd.f32 %v2307, %v2293
        %v2309 = vadd.f32 %v2308, %v2294
        %v2310 = vadd.f32 %v2309, %v2295
        %v2311 = vadd.f32 %v2310, %v2296
        %v2312 = vadd.f32 %v2311, %v2297
        %v2313 = vadd.f32 %v2312, %v2298
        %v2314 = vadd.f32 %v2313, %v2299
        %v2315 = vadd.f32 %v2314, %v2300
        %v2316 = vadd.f32 %v2315, %v2301
        %v2317 = vadd.f32 %v2316, %v2302
        %v2318 = vadd.f32 %v2317, %v2303
        %v2319 = vadd.f32 %v2318, %v2304
        %v2320 = vadd.f32 %v2319, %v2305
        %v2321 = vadd.f32 %v2320, %v2306
        %v2322 = vrot.slane %v2321, 4
        %v2323 = vadd.f32 %v2321, %v2322
        %v2324 = vrot.slane %v2323, 2
        %v2325 = vadd.f32 %v2323, %v2324
        %v2326 = vrot.slane %v2325, 1
        %v2327 = vadd.f32 %v2325, %v2326
        %v2328 = vadd.f32 %v2327, 0.0
        %2329 = vst [vmem:[%s209] sm:$0xff] %v2328
        %v2330 = vld [vmem:[#allocation2] sm:$0xff]
        %v2331 = vld [vmem:[#allocation2 + $0x8] sm:$0xff]
        %v2334 = vperm.slane %v2330, 0
        %v2335 = vperm.slane %v2330, 1
        %v2336 = vperm.slane %v2330, 2
        %v2337 = vperm.slane %v2330, 3
        %v2338 = vperm.slane %v2330, 4
        %v2339 = vperm.slane %v2330, 5
        %v2340 = vperm.slane %v2330, 6
        %v2341 = vperm.slane %v2330, 7
        %v2342 = vperm.slane %v2331, 0
        %v2343 = vperm.slane %v2331, 1
        %v2344 = vperm.slane %v2331, 2
        %v2345 = vperm.slane %v2331, 3
        %v2346 = vperm.slane %v2331, 4
        %v2347 = vperm.slane %v2331, 5
        %v2348 = vperm.slane %v2331, 6
        %v2349 = vperm.slane %v2331, 7
        %2366 = vst [vmem:[%s216] sm:$0xff] %v2334
        %2367 = vst [vmem:[%s216 + $0x8] sm:$0xff] %v2335
        %2368 = vst [vmem:[%s216 + $0x10] sm:$0xff] %v2336
        %2369 = vst [vmem:[%s216 + $0x18] sm:$0xff] %v2337
        %2370 = vst [vmem:[%s216 + $0x20] sm:$0xff] %v2338
        %2371 = vst [vmem:[%s216 + $0x28] sm:$0xff] %v2339
        %2372 = vst [vmem:[%s216 + $0x30] sm:$0xff] %v2340
        %2373 = vst [vmem:[%s216 + $0x38] sm:$0xff] %v2341
        %2374 = vst [vmem:[%s216 + $0x40] sm:$0xff] %v2342
        %2375 = vst [vmem:[%s216 + $0x48] sm:$0xff] %v2343
        %2376 = vst [vmem:[%s216 + $0x50] sm:$0xff] %v2344
        %2377 = vst [vmem:[%s216 + $0x58] sm:$0xff] %v2345
        %2378 = vst [vmem:[%s216 + $0x60] sm:$0xff] %v2346
        %2379 = vst [vmem:[%s216 + $0x68] sm:$0xff] %v2347
        %2380 = vst [vmem:[%s216 + $0x70] sm:$0xff] %v2348
        %2381 = vst [vmem:[%s216 + $0x78] sm:$0xff] %v2349
        %s2382 = sand.u32 %s97, 1
        %s2383 = scalar_lea.sflag [#allocation4], %s2382
        %s2384 = sand.u32 %s97, 1
        %s2385 = smul.addr %s2384, 8
        %s2386 = scalar_lea.vmem [#allocation3], %s2385
        %s2387 = sand.u32 %s125, 1
        %s2388 = scalar_lea.sflag [#allocation6], %s2387
        %s2389 = sand.u32 %s125, 1
        %s2390 = smul.addr %s2389, 128
        %s2391 = scalar_lea.vmem [#allocation5], %s2390
        // Predicated region
        $region29: #{tpu_custom_call.1} parent=27 // pred_check
          %p2392 = pneg %p107
        $region30: #{tpu_custom_call.1} parent=27 // pred_check_branch
          %2394 = sbr.rel (%p2392) target = $region32
        $region31: #{tpu_custom_call.1} parent=27 // pred_region
          %2396 = vsyncadd %s2383, 0
          %s2397 = smul.addr %s25, 2
          %s2398 = sadd.s32 %s26, %s2397
          %s2399 = smul.addr %s2398, 8
          %s2400 = scalar_lea.hbm %s2, %s2399
          %s2402 = sshll.u32 %s2386, 4
          %s2403 = int_to_ptr.vmem [resolvable:$true] %s2402
          %s2404 = sshll.u32 %s2400, 4
          %s2405 = int_to_ptr.hbm [resolvable:$true] %s2404
          %2407 = dma.vmem_to_hbm [thread:$0]  %s2403, 128, %s2405, %s2383
        $region32: #{tpu_custom_call.1} parent=27 // pred_fallthru
          _
        // Predicated region
        $region33: #{tpu_custom_call.1} parent=27 // pred_check
          %p2408 = pneg %p135
        $region34: #{tpu_custom_call.1} parent=27 // pred_check_branch
          %2410 = sbr.rel (%p2408) target = $region36
        $region35: #{tpu_custom_call.1} parent=27 // pred_region
          %2412 = vsyncadd %s2388, 0
          %s2413 = smul.addr %s26, 16
          %s2414 = smul.addr %s25, 32
          %s2415 = sadd.s32 %s2413, %s2414
          %s2416 = smul.addr %s2415, 8
          %s2417 = scalar_lea.hbm %s3, %s2416
          %s2419 = sshll.u32 %s2391, 4
          %s2420 = int_to_ptr.vmem [resolvable:$true] %s2419
          %s2421 = sshll.u32 %s2417, 4
          %s2422 = int_to_ptr.hbm [resolvable:$true] %s2421
          %2424 = dma.vmem_to_hbm [thread:$0]  %s2420, 2048, %s2422, %s2388
        $region36: #{tpu_custom_call.1} parent=27 // pred_fallthru
          _
      $region28: #{tpu_custom_call.1} parent=5 // pred_fallthru
        _
      %p2425 = scmp.le.s32.totalorder 2, %s16
      // Predicated region
      $region37: #{tpu_custom_call.1} parent=5 // pred_check
        %p2426 = pneg %p2425
      $region38: #{tpu_custom_call.1} parent=5 // pred_check_branch
        %2428 = sbr.rel (%p2426) target = $region40
      $region39: #{tpu_custom_call.1} parent=5 // pred_region
        %s2429 = ssub.s32 %s16, 2
        // Predicated region
        $region41: #{tpu_custom_call.1} parent=39 // pred_check
          %p2430 = pneg %p113
        $region42: #{tpu_custom_call.1} parent=39 // pred_check_branch
          %2432 = sbr.rel (%p2430) target = $region44
        $region43: #{tpu_custom_call.1} parent=39 // pred_region
          %s2433 = sand.u32 %s98, 1
          %s2434 = scalar_lea.sflag [#allocation4], %s2433
          %s2435 = sand.u32 %s98, 1
          %s2436 = smul.addr %s2435, 8
          %s2437 = scalar_lea.vmem [#allocation3], %s2436
          %2439 = dma.done %s2434, 128
        $region44: #{tpu_custom_call.1} parent=39 // pred_fallthru
          _
        // Predicated region
        $region45: #{tpu_custom_call.1} parent=39 // pred_check
          %p2440 = pneg %p141
        $region46: #{tpu_custom_call.1} parent=39 // pred_check_branch
          %2442 = sbr.rel (%p2440) target = $region48
        $region47: #{tpu_custom_call.1} parent=39 // pred_region
          %s2443 = sand.u32 %s126, 1
          %s2444 = scalar_lea.sflag [#allocation6], %s2443
          %s2445 = sand.u32 %s126, 1
          %s2446 = smul.addr %s2445, 128
          %s2447 = scalar_lea.vmem [#allocation5], %s2446
          %2449 = dma.done %s2444, 2048
        $region48: #{tpu_custom_call.1} parent=39 // pred_fallthru
          _
      $region40: #{tpu_custom_call.1} parent=5 // pred_fallthru
        _
    $region6: #{tpu_custom_call.1} parent=1 // loop_footer
      %s20 = sadd.s32 1, %s16
    $region7: #{tpu_custom_call.1} parent=1 // loop_footer_branch
      %15 = sbr.rel target = $region3
    $region8: #{tpu_custom_call.1} parent=1 // loop_exit
      _
    %2450 = vsyncpa [#allocation4], 1
    %s2451 = scalar_lea.sflag [#allocation4], 1
    %2452 = vsyncpa %s2451, 1
    %2453 = vsyncpa [#allocation6], 1
    %s2454 = scalar_lea.sflag [#allocation6], 1
    %2455 = vsyncpa %s2454, 1

</llo_original>
